<compile_context>
chip_gen: v7x
topology: tpu7x:2x2x1
jax: 0.10.0
libtpu: 0.0.40
codegen_flags: <defaults>
</compile_context>

<pallas_src>
import functools

import jax
import jax.numpy as jnp
from jax.experimental import pallas as pl
from jax.experimental.pallas import tpu as pltpu

EPS = 1e-5
_LANE = 128


def _round_up(n, m):
    return (n + m - 1) // m * m


# --------------------------------------------------------------------------
# Kernel
# --------------------------------------------------------------------------
def _fwd_kernel(
    inp_ref, h_ref, c_ref, vec_ref,
    w1_ref, w2_ref, wih_ref, whh_ref,
    wp1h_ref, wp1c_ref, wp2_ref, wp3_ref,
    out_ref, *, layout, H, C,
):
    def vec(name):
        off, n = layout[name]          # static, lane-aligned offsets
        return vec_ref[:, off:off + n]

    def mm(a, w_ref):
        # bf16 x bf16 -> f32 accumulation on the MXU.
        return jnp.dot(a.astype(jnp.bfloat16), w_ref[...],
                       preferred_element_type=jnp.float32)

    def bn(x, gname, bname, relu=True):
        # Training-mode BatchNorm1d.  mu and E[x^2] come from the same input
        # pass (var = E[x^2] - mu^2) so the two cross-sublane reductions can
        # issue back-to-back; gamma*rsqrt folded into one scale/shift.
        inv_n = 1.0 / x.shape[0]
        mu = jnp.sum(x, axis=0, keepdims=True) * inv_n
        ex2 = jnp.sum(x * x, axis=0, keepdims=True) * inv_n
        scale = vec(gname) * jax.lax.rsqrt(ex2 - mu * mu + EPS)
        y = x * scale + (vec(bname) - mu * scale)
        return jnp.maximum(y, 0.0) if relu else y

    x = inp_ref[...]
    h = h_ref[...]
    c = c_ref[...]

    # ---- projector: Linear -> BN -> ReLU -> Linear -> BN -> ReLU ----------
    # (Linear biases dropped: they cancel inside training-mode BN.)
    x = bn(mm(x, w1_ref), "g1", "be1")
    x = bn(mm(x, w2_ref), "g2", "be2")

    # ---- LSTMCell; gate columns [i|f|g|o]; bih+bhh pre-summed --------------
    gates = mm(x, wih_ref) + mm(h, whh_ref) + vec("b_lstm")      # (B, 4H)
    lane = jax.lax.broadcasted_iota(jnp.int32, gates.shape, 1)
    tanh_lane = (lane >= 2 * H) & (lane < 3 * H)
    # sigmoid(x) == 0.5 * tanh(0.5 * x) + 0.5 -> one full-vreg EUP tanh
    # covers all four gates; the sigmoid lanes get a cheap VALU fixup.
    t = jnp.tanh(jnp.where(tanh_lane, gates, 0.5 * gates))
    act = jnp.where(tanh_lane, t, 0.5 * t + 0.5)
    i_g = act[:, 0 * H:1 * H]
    f_g = act[:, 1 * H:2 * H]
    g_g = act[:, 2 * H:3 * H]
    o_g = act[:, 3 * H:4 * H]
    c_new = f_g * c + i_g * g_g
    h_new = o_g * jnp.tanh(c_new)

    # ---- predictor on cat([h, c], dim=1) as a split (concat-free) matmul ---
    y = mm(h_new, wp1h_ref) + mm(c_new, wp1c_ref)
    y = bn(y, "gp1", "bep1")
    y = bn(mm(y, wp2_ref), "gp2", "bep2")
    y = bn(mm(y, wp3_ref), "gp3", "bep3", relu=False)

    # softmax over categories (dim=1)
    m = jnp.max(y, axis=1, keepdims=True)
    e = jnp.exp(y - m)
    probs = e * pl.reciprocal(jnp.sum(e, axis=1, keepdims=True), approx=True)

    # ---- single lane-dense output slab: [h_new | c_new | probs | 0-pad] ----
    B = out_ref.shape[0]
    out_ref[:, 0:H] = h_new
    out_ref[:, H:2 * H] = c_new
    out_ref[:, 2 * H:2 * H + C] = probs
    pad = out_ref.shape[1] - (2 * H + C)
    if pad > 0:
        out_ref[:, 2 * H + C:] = jnp.zeros((B, pad), jnp.float32)


# --------------------------------------------------------------------------
# Wrapper
# --------------------------------------------------------------------------
def _pack_vectors(entries):
    """Pack (1, n) vectors into one (1, total) f32 array.  Each segment is
    padded to a multiple of 128 lanes so in-kernel slices stay lane-aligned."""
    parts, layout, off = [], {}, 0
    for name, v in entries:
        v = v.astype(jnp.float32).reshape(1, -1)
        n = v.shape[1]
        padded = _round_up(n, _LANE)
        parts.append(jnp.pad(v, ((0, 0), (0, padded - n))))
        layout[name] = (off, n)
        off += padded
    return jnp.concatenate(parts, axis=1), layout


@jax.jit
def slip_detect_global_lstm_forward(inp, h, c, params):
    B = inp.shape[0]
    H = h.shape[1]
    C = params["wp3"].shape[1]

    # Pre-BN Linear biases cancel in training-mode BN -> dropped entirely.
    vec_packed, layout = _pack_vectors([
        ("g1", params["g1"]), ("be1", params["be1"]),
        ("g2", params["g2"]), ("be2", params["be2"]),
        ("b_lstm", params["bih"] + params["bhh"]),
        ("gp1", params["gp1"]), ("bep1", params["bep1"]),
        ("gp2", params["gp2"]), ("bep2", params["bep2"]),
        ("gp3", params["gp3"]), ("bep3", params["bep3"]),
    ])

    bf16 = lambda w: w.astype(jnp.bfloat16)
    weights = [
        bf16(params["w1"]), bf16(params["w2"]),
        bf16(params["wih"]), bf16(params["whh"]),
        bf16(params["wp1"][:H, :]), bf16(params["wp1"][H:, :]),   # split wp1
        bf16(params["wp2"]), bf16(params["wp3"]),
    ]

    out_w = _round_up(2 * H + C, _LANE)
    vmem = pl.BlockSpec(memory_space=pltpu.MemorySpace.VMEM)
    operands = [inp, h, c, vec_packed] + weights

    slab = pl.pallas_call(
        functools.partial(_fwd_kernel, layout=layout, H=H, C=C),
        out_shape=jax.ShapeDtypeStruct((B, out_w), jnp.float32),
        in_specs=[vmem] * len(operands),
        out_specs=vmem,
    )(*operands)

    probs = slab[:, 2 * H:2 * H + C]
    h_new = slab[:, 0:H]
    c_new = slab[:, H:2 * H]
    return probs, h_new, c_new


# --------------------------------------------------------------------------
# Independent pure-JAX reference (standard BN formula, original biases,
# unsplit wp1, separate bih/bhh, standard sigmoid) — verifies both the math
# and the wrapper-side parameter transformations.
# --------------------------------------------------------------------------
def _bn_ref(x, g, b):
    mu = jnp.mean(x, axis=0, keepdims=True)
    var = jnp.mean((x - mu) ** 2, axis=0, keepdims=True)
    return (x - mu) / jnp.sqrt(var + EPS) * g + b


def _reference_forward(inp, h, c, p, matmul_dtype):
    def mm(a, w):
        return jnp.dot(a.astype(matmul_dtype), w.astype(matmul_dtype),
                       preferred_element_type=jnp.float32)
    x = jnp.maximum(_bn_ref(mm(inp, p["w1"]) + p["b1"], p["g1"], p["be1"]), 0.0)
    x = jnp.maximum(_bn_ref(mm(x, p["w2"]) + p["b2"], p["g2"], p["be2"]), 0.0)
    gates = mm(x, p["wih"]) + p["bih"] + mm(h, p["whh"]) + p["bhh"]
    H = h.shape[1]
    i_g = jax.nn.sigmoid(gates[:, 0 * H:1 * H])
    f_g = jax.nn.sigmoid(gates[:, 1 * H:2 * H])
    g_g = jnp.tanh(gates[:, 2 * H:3 * H])
    o_g = jax.nn.sigmoid(gates[:, 3 * H:4 * H])
    c_new = f_g * c + i_g * g_g
    h_new = o_g * jnp.tanh(c_new)
    y = jnp.concatenate([h_new, c_new], axis=1)
    y = jnp.maximum(_bn_ref(mm(y, p["wp1"]) + p["bp1"], p["gp1"], p["bep1"]), 0.0)
    y = jnp.maximum(_bn_ref(mm(y, p["wp2"]) + p["bp2"], p["gp2"], p["bep2"]), 0.0)
    y = _bn_ref(mm(y, p["wp3"]) + p["bp3"], p["gp3"], p["bep3"])
    return jax.nn.softmax(y, axis=1), h_new, c_new


def _init_params(key, input_dim, hidden_dim, categories):
    ks = jax.random.split(key, 16)

    def lin(k, fan_in, fan_out):
        return jax.random.normal(k, (fan_in, fan_out), jnp.float32) * 0.05

    def vec(k, n, base=0.0, scale=0.02):
        return (base + jax.random.normal(k, (1, n), jnp.float32) * scale).astype(jnp.float32)

    H, C = hidden_dim, categories
    return {
        # projector
        "w1": lin(ks[0], input_dim, 1024), "b1": vec(ks[1], 1024),
        "g1": vec(ks[1], 1024, base=1.0), "be1": vec(ks[2], 1024),
        "w2": lin(ks[3], 1024, H), "b2": vec(ks[4], H),
        "g2": vec(ks[4], H, base=1.0), "be2": vec(ks[5], H),
        # LSTM cell (gate columns [i|f|g|o])
        "wih": lin(ks[6], H, 4 * H), "bih": vec(ks[7], 4 * H),
        "whh": lin(ks[8], H, 4 * H), "bhh": vec(ks[9], 4 * H),
        # predictor
        "wp1": lin(ks[10], 2 * H, 256), "bp1": vec(ks[11], 256),
        "gp1": vec(ks[11], 256, base=1.0), "bep1": vec(ks[12], 256),
        "wp2": lin(ks[12], 256, 128), "bp2": vec(ks[13], 128),
        "gp2": vec(ks[13], 128, base=1.0), "bep2": vec(ks[14], 128),
        "wp3": lin(ks[14], 128, C), "bp3": vec(ks[15], C),
        "gp3": vec(ks[15], C, base=1.0), "bep3": vec(ks[0], C),
    }


if __name__ == "__main__":
    BATCH, INPUT_DIM, HIDDEN_DIM, CATEGORIES = 8, 64, 32, 4

    key = jax.random.PRNGKey(0)
    k_inp, k_h, k_c, k_par = jax.random.split(key, 4)

    inp = jax.random.normal(k_inp, (BATCH, INPUT_DIM), jnp.float32)
    h0 = jax.random.normal(k_h, (BATCH, HIDDEN_DIM), jnp.float32)
    c0 = jax.random.normal(k_c, (BATCH, HIDDEN_DIM), jnp.float32)
    params = _init_params(k_par, INPUT_DIM, HIDDEN_DIM, CATEGORIES)

    probs, h1, c1 = slip_detect_global_lstm_forward(inp, h0, c0, params)
    jax.block_until_ready((probs, h1, c1))
    assert probs.shape == (BATCH, CATEGORIES)
    assert h1.shape == (BATCH, HIDDEN_DIM) and c1.shape == (BATCH, HIDDEN_DIM)

    # Matched-precision check (same bf16 matmuls as the kernel, independent BN
    # formula, original biases / unsplit weights / standard sigmoid).
    ref_p, ref_h, ref_c = _reference_forward(inp, h0, c0, params, jnp.bfloat16)
    assert jnp.allclose(probs, ref_p, atol=5e-3, rtol=1e-2)
    assert jnp.allclose(h1, ref_h, atol=5e-3, rtol=1e-2)
    assert jnp.allclose(c1, ref_c, atol=5e-3, rtol=1e-2)

    # Loose check against full-f32 math (guards against gross semantic bugs).
    f32_p, f32_h, f32_c = _reference_forward(inp, h0, c0, params, jnp.float32)
    assert jnp.allclose(probs, f32_p, atol=0.1)
    assert jnp.allclose(h1, f32_h, atol=0.1)
    assert jnp.allclose(c1, f32_c, atol=0.1)

    print("KERNEL_OK")
</pallas_src>

<mosaic_0001>
module attributes {stable_mosaic.version = 11 : i64} {
  func.func @_fwd_kernel(%arg0: memref<8x64xf32, #tpu.memory_space<vmem>>, %arg1: memref<8x32xf32, #tpu.memory_space<vmem>>, %arg2: memref<8x32xf32, #tpu.memory_space<vmem>>, %arg3: memref<1x3456xf32, #tpu.memory_space<vmem>>, %arg4: memref<64x1024xbf16, #tpu.memory_space<vmem>>, %arg5: memref<1024x32xbf16, #tpu.memory_space<vmem>>, %arg6: memref<32x128xbf16, #tpu.memory_space<vmem>>, %arg7: memref<32x128xbf16, #tpu.memory_space<vmem>>, %arg8: memref<32x256xbf16, #tpu.memory_space<vmem>>, %arg9: memref<32x256xbf16, #tpu.memory_space<vmem>>, %arg10: memref<256x128xbf16, #tpu.memory_space<vmem>>, %arg11: memref<128x4xbf16, #tpu.memory_space<vmem>>, %arg12: memref<8x128xf32, #tpu.memory_space<vmem>>) attributes {dimension_semantics = [], scalar_prefetch = 0 : i64, scratch_operands = 0 : i64, tpu.core_type = #tpu.core_type<tc>} {
    %c0 = arith.constant 0 : index
    %c0_0 = arith.constant 0 : index
    %0 = vector.load %arg0[%c0, %c0_0] : memref<8x64xf32, #tpu.memory_space<vmem>>, vector<8x64xf32>
    %c0_1 = arith.constant 0 : index
    %c0_2 = arith.constant 0 : index
    %1 = vector.load %arg1[%c0_1, %c0_2] : memref<8x32xf32, #tpu.memory_space<vmem>>, vector<8x32xf32>
    %c0_3 = arith.constant 0 : index
    %c0_4 = arith.constant 0 : index
    %2 = vector.load %arg2[%c0_3, %c0_4] : memref<8x32xf32, #tpu.memory_space<vmem>>, vector<8x32xf32>
    %3 = arith.truncf %0 : vector<8x64xf32> to vector<8x64xbf16>
    %c0_5 = arith.constant 0 : index
    %c0_6 = arith.constant 0 : index
    %4 = vector.load %arg4[%c0_5, %c0_6] : memref<64x1024xbf16, #tpu.memory_space<vmem>>, vector<64x1024xbf16>
    %cst = arith.constant dense<0.000000e+00> : vector<8x1024xf32>
    %5 = tpu.matmul %3, %4, %cst {dimension_numbers = #tpu.dot_dimension_numbers<[1], [0], [0], [1], [0, 0, 1, 1], [], []>} : vector<8x64xbf16>, vector<64x1024xbf16>, vector<8x1024xf32> -> vector<8x1024xf32>
    %cst_7 = arith.constant dense<0.000000e+00> : vector<1024xf32>
    %6 = vector.multi_reduction <add>, %5, %cst_7 [0] : vector<8x1024xf32> to vector<1024xf32>
    %7 = vector.shape_cast %6 : vector<1024xf32> to vector<1x1024xf32>
    %cst_8 = arith.constant 1.250000e-01 : f32
    %8 = vector.broadcast %cst_8 : f32 to vector<1x1024xf32>
    %9 = arith.mulf %7, %8 : vector<1x1024xf32>
    %10 = arith.mulf %5, %5 : vector<8x1024xf32>
    %cst_9 = arith.constant dense<0.000000e+00> : vector<1024xf32>
    %11 = vector.multi_reduction <add>, %10, %cst_9 [0] : vector<8x1024xf32> to vector<1024xf32>
    %12 = vector.shape_cast %11 : vector<1024xf32> to vector<1x1024xf32>
    %cst_10 = arith.constant 1.250000e-01 : f32
    %13 = vector.broadcast %cst_10 : f32 to vector<1x1024xf32>
    %14 = arith.mulf %12, %13 : vector<1x1024xf32>
    %c0_11 = arith.constant 0 : index
    %c0_12 = arith.constant 0 : index
    %15 = vector.load %arg3[%c0_11, %c0_12] : memref<1x3456xf32, #tpu.memory_space<vmem>>, vector<1x1024xf32>
    %16 = arith.mulf %9, %9 : vector<1x1024xf32>
    %17 = arith.subf %14, %16 : vector<1x1024xf32>
    %cst_13 = arith.constant 9.99999974E-6 : f32
    %18 = vector.broadcast %cst_13 : f32 to vector<1x1024xf32>
    %19 = arith.addf %17, %18 : vector<1x1024xf32>
    %20 = math.rsqrt %19 : vector<1x1024xf32>
    %21 = arith.mulf %15, %20 : vector<1x1024xf32>
    %22 = vector.broadcast %21 : vector<1x1024xf32> to vector<8x1024xf32>
    %23 = arith.mulf %5, %22 : vector<8x1024xf32>
    %c0_14 = arith.constant 0 : index
    %c1024 = arith.constant 1024 : index
    %24 = vector.load %arg3[%c0_14, %c1024] : memref<1x3456xf32, #tpu.memory_space<vmem>>, vector<1x1024xf32>
    %25 = arith.mulf %9, %21 : vector<1x1024xf32>
    %26 = arith.subf %24, %25 : vector<1x1024xf32>
    %27 = vector.broadcast %26 : vector<1x1024xf32> to vector<8x1024xf32>
    %28 = arith.addf %23, %27 : vector<8x1024xf32>
    %cst_15 = arith.constant 0.000000e+00 : f32
    %29 = vector.broadcast %cst_15 : f32 to vector<8x1024xf32>
    %30 = arith.maximumf %28, %29 : vector<8x1024xf32>
    %31 = arith.truncf %30 : vector<8x1024xf32> to vector<8x1024xbf16>
    %c0_16 = arith.constant 0 : index
    %c0_17 = arith.constant 0 : index
    %32 = vector.load %arg5[%c0_16, %c0_17] : memref<1024x32xbf16, #tpu.memory_space<vmem>>, vector<1024x32xbf16>
    %cst_18 = arith.constant dense<0.000000e+00> : vector<8x32xf32>
    %33 = tpu.matmul %31, %32, %cst_18 {dimension_numbers = #tpu.dot_dimension_numbers<[1], [0], [0], [1], [0, 0, 1, 1], [], []>} : vector<8x1024xbf16>, vector<1024x32xbf16>, vector<8x32xf32> -> vector<8x32xf32>
    %cst_19 = arith.constant dense<0.000000e+00> : vector<32xf32>
    %34 = vector.multi_reduction <add>, %33, %cst_19 [0] : vector<8x32xf32> to vector<32xf32>
    %35 = vector.shape_cast %34 : vector<32xf32> to vector<1x32xf32>
    %cst_20 = arith.constant 1.250000e-01 : f32
    %36 = vector.broadcast %cst_20 : f32 to vector<1x32xf32>
    %37 = arith.mulf %35, %36 : vector<1x32xf32>
    %38 = arith.mulf %33, %33 : vector<8x32xf32>
    %cst_21 = arith.constant dense<0.000000e+00> : vector<32xf32>
    %39 = vector.multi_reduction <add>, %38, %cst_21 [0] : vector<8x32xf32> to vector<32xf32>
    %40 = vector.shape_cast %39 : vector<32xf32> to vector<1x32xf32>
    %cst_22 = arith.constant 1.250000e-01 : f32
    %41 = vector.broadcast %cst_22 : f32 to vector<1x32xf32>
    %42 = arith.mulf %40, %41 : vector<1x32xf32>
    %c0_23 = arith.constant 0 : index
    %c2048 = arith.constant 2048 : index
    %43 = vector.load %arg3[%c0_23, %c2048] : memref<1x3456xf32, #tpu.memory_space<vmem>>, vector<1x32xf32>
    %44 = arith.mulf %37, %37 : vector<1x32xf32>
    %45 = arith.subf %42, %44 : vector<1x32xf32>
    %cst_24 = arith.constant 9.99999974E-6 : f32
    %46 = vector.broadcast %cst_24 : f32 to vector<1x32xf32>
    %47 = arith.addf %45, %46 : vector<1x32xf32>
    %48 = math.rsqrt %47 : vector<1x32xf32>
    %49 = arith.mulf %43, %48 : vector<1x32xf32>
    %50 = vector.broadcast %49 : vector<1x32xf32> to vector<8x32xf32>
    %51 = arith.mulf %33, %50 : vector<8x32xf32>
    %c0_25 = arith.constant 0 : index
    %c2176 = arith.constant 2176 : index
    %52 = vector.load %arg3[%c0_25, %c2176] : memref<1x3456xf32, #tpu.memory_space<vmem>>, vector<1x32xf32>
    %53 = arith.mulf %37, %49 : vector<1x32xf32>
    %54 = arith.subf %52, %53 : vector<1x32xf32>
    %55 = vector.broadcast %54 : vector<1x32xf32> to vector<8x32xf32>
    %56 = arith.addf %51, %55 : vector<8x32xf32>
    %cst_26 = arith.constant 0.000000e+00 : f32
    %57 = vector.broadcast %cst_26 : f32 to vector<8x32xf32>
    %58 = arith.maximumf %56, %57 : vector<8x32xf32>
    %59 = arith.truncf %58 : vector<8x32xf32> to vector<8x32xbf16>
    %c0_27 = arith.constant 0 : index
    %c0_28 = arith.constant 0 : index
    %60 = vector.load %arg6[%c0_27, %c0_28] : memref<32x128xbf16, #tpu.memory_space<vmem>>, vector<32x128xbf16>
    %cst_29 = arith.constant dense<0.000000e+00> : vector<8x128xf32>
    %61 = tpu.matmul %59, %60, %cst_29 {dimension_numbers = #tpu.dot_dimension_numbers<[1], [0], [0], [1], [0, 0, 1, 1], [], []>} : vector<8x32xbf16>, vector<32x128xbf16>, vector<8x128xf32> -> vector<8x128xf32>
    %62 = arith.truncf %1 : vector<8x32xf32> to vector<8x32xbf16>
    %c0_30 = arith.constant 0 : index
    %c0_31 = arith.constant 0 : index
    %63 = vector.load %arg7[%c0_30, %c0_31] : memref<32x128xbf16, #tpu.memory_space<vmem>>, vector<32x128xbf16>
    %cst_32 = arith.constant dense<0.000000e+00> : vector<8x128xf32>
    %64 = tpu.matmul %62, %63, %cst_32 {dimension_numbers = #tpu.dot_dimension_numbers<[1], [0], [0], [1], [0, 0, 1, 1], [], []>} : vector<8x32xbf16>, vector<32x128xbf16>, vector<8x128xf32> -> vector<8x128xf32>
    %65 = arith.addf %61, %64 : vector<8x128xf32>
    %c0_33 = arith.constant 0 : index
    %c2304 = arith.constant 2304 : index
    %66 = vector.load %arg3[%c0_33, %c2304] : memref<1x3456xf32, #tpu.memory_space<vmem>>, vector<1x128xf32>
    %67 = vector.broadcast %66 : vector<1x128xf32> to vector<8x128xf32>
    %68 = arith.addf %65, %67 : vector<8x128xf32>
    %69 = tpu.iota {dimensions = array<i32: 1>} : vector<8x128xi32>
    %c64_i32 = arith.constant 64 : i32
    %70 = vector.broadcast %c64_i32 : i32 to vector<8x128xi32>
    %71 = arith.cmpi sge, %69, %70 : vector<8x128xi32>
    %c96_i32 = arith.constant 96 : i32
    %72 = vector.broadcast %c96_i32 : i32 to vector<8x128xi32>
    %73 = arith.cmpi slt, %69, %72 : vector<8x128xi32>
    %74 = arith.andi %71, %73 : vector<8x128xi1>
    %cst_34 = arith.constant 5.000000e-01 : f32
    %75 = vector.broadcast %cst_34 : f32 to vector<8x128xf32>
    %76 = arith.mulf %75, %68 : vector<8x128xf32>
    %77 = arith.select %74, %68, %76 : vector<8x128xi1>, vector<8x128xf32>
    %78 = math.tanh %77 : vector<8x128xf32>
    %cst_35 = arith.constant 5.000000e-01 : f32
    %79 = vector.broadcast %cst_35 : f32 to vector<8x128xf32>
    %80 = arith.mulf %79, %78 : vector<8x128xf32>
    %cst_36 = arith.constant 5.000000e-01 : f32
    %81 = vector.broadcast %cst_36 : f32 to vector<8x128xf32>
    %82 = arith.addf %80, %81 : vector<8x128xf32>
    %83 = arith.select %74, %78, %82 : vector<8x128xi1>, vector<8x128xf32>
    %84 = vector.extract_strided_slice %83 {offsets = [0, 0], sizes = [8, 32], strides = [1, 1]} : vector<8x128xf32> to vector<8x32xf32>
    %85 = vector.extract_strided_slice %83 {offsets = [0, 32], sizes = [8, 32], strides = [1, 1]} : vector<8x128xf32> to vector<8x32xf32>
    %86 = vector.extract_strided_slice %83 {offsets = [0, 64], sizes = [8, 32], strides = [1, 1]} : vector<8x128xf32> to vector<8x32xf32>
    %87 = vector.extract_strided_slice %83 {offsets = [0, 96], sizes = [8, 32], strides = [1, 1]} : vector<8x128xf32> to vector<8x32xf32>
    %88 = arith.mulf %85, %2 : vector<8x32xf32>
    %89 = arith.mulf %84, %86 : vector<8x32xf32>
    %90 = arith.addf %88, %89 : vector<8x32xf32>
    %91 = math.tanh %90 : vector<8x32xf32>
    %92 = arith.mulf %87, %91 : vector<8x32xf32>
    %93 = arith.truncf %92 : vector<8x32xf32> to vector<8x32xbf16>
    %c0_37 = arith.constant 0 : index
    %c0_38 = arith.constant 0 : index
    %94 = vector.load %arg8[%c0_37, %c0_38] : memref<32x256xbf16, #tpu.memory_space<vmem>>, vector<32x256xbf16>
    %cst_39 = arith.constant dense<0.000000e+00> : vector<8x256xf32>
    %95 = tpu.matmul %93, %94, %cst_39 {dimension_numbers = #tpu.dot_dimension_numbers<[1], [0], [0], [1], [0, 0, 1, 1], [], []>} : vector<8x32xbf16>, vector<32x256xbf16>, vector<8x256xf32> -> vector<8x256xf32>
    %96 = arith.truncf %90 : vector<8x32xf32> to vector<8x32xbf16>
    %c0_40 = arith.constant 0 : index
    %c0_41 = arith.constant 0 : index
    %97 = vector.load %arg9[%c0_40, %c0_41] : memref<32x256xbf16, #tpu.memory_space<vmem>>, vector<32x256xbf16>
    %cst_42 = arith.constant dense<0.000000e+00> : vector<8x256xf32>
    %98 = tpu.matmul %96, %97, %cst_42 {dimension_numbers = #tpu.dot_dimension_numbers<[1], [0], [0], [1], [0, 0, 1, 1], [], []>} : vector<8x32xbf16>, vector<32x256xbf16>, vector<8x256xf32> -> vector<8x256xf32>
    %99 = arith.addf %95, %98 : vector<8x256xf32>
    %cst_43 = arith.constant dense<0.000000e+00> : vector<256xf32>
    %100 = vector.multi_reduction <add>, %99, %cst_43 [0] : vector<8x256xf32> to vector<256xf32>
    %101 = vector.shape_cast %100 : vector<256xf32> to vector<1x256xf32>
    %cst_44 = arith.constant 1.250000e-01 : f32
    %102 = vector.broadcast %cst_44 : f32 to vector<1x256xf32>
    %103 = arith.mulf %101, %102 : vector<1x256xf32>
    %104 = arith.mulf %99, %99 : vector<8x256xf32>
    %cst_45 = arith.constant dense<0.000000e+00> : vector<256xf32>
    %105 = vector.multi_reduction <add>, %104, %cst_45 [0] : vector<8x256xf32> to vector<256xf32>
    %106 = vector.shape_cast %105 : vector<256xf32> to vector<1x256xf32>
    %cst_46 = arith.constant 1.250000e-01 : f32
    %107 = vector.broadcast %cst_46 : f32 to vector<1x256xf32>
    %108 = arith.mulf %106, %107 : vector<1x256xf32>
    %c0_47 = arith.constant 0 : index
    %c2432 = arith.constant 2432 : index
    %109 = vector.load %arg3[%c0_47, %c2432] : memref<1x3456xf32, #tpu.memory_space<vmem>>, vector<1x256xf32>
    %110 = arith.mulf %103, %103 : vector<1x256xf32>
    %111 = arith.subf %108, %110 : vector<1x256xf32>
    %cst_48 = arith.constant 9.99999974E-6 : f32
    %112 = vector.broadcast %cst_48 : f32 to vector<1x256xf32>
    %113 = arith.addf %111, %112 : vector<1x256xf32>
    %114 = math.rsqrt %113 : vector<1x256xf32>
    %115 = arith.mulf %109, %114 : vector<1x256xf32>
    %116 = vector.broadcast %115 : vector<1x256xf32> to vector<8x256xf32>
    %117 = arith.mulf %99, %116 : vector<8x256xf32>
    %c0_49 = arith.constant 0 : index
    %c2688 = arith.constant 2688 : index
    %118 = vector.load %arg3[%c0_49, %c2688] : memref<1x3456xf32, #tpu.memory_space<vmem>>, vector<1x256xf32>
    %119 = arith.mulf %103, %115 : vector<1x256xf32>
    %120 = arith.subf %118, %119 : vector<1x256xf32>
    %121 = vector.broadcast %120 : vector<1x256xf32> to vector<8x256xf32>
    %122 = arith.addf %117, %121 : vector<8x256xf32>
    %cst_50 = arith.constant 0.000000e+00 : f32
    %123 = vector.broadcast %cst_50 : f32 to vector<8x256xf32>
    %124 = arith.maximumf %122, %123 : vector<8x256xf32>
    %125 = arith.truncf %124 : vector<8x256xf32> to vector<8x256xbf16>
    %c0_51 = arith.constant 0 : index
    %c0_52 = arith.constant 0 : index
    %126 = vector.load %arg10[%c0_51, %c0_52] : memref<256x128xbf16, #tpu.memory_space<vmem>>, vector<256x128xbf16>
    %cst_53 = arith.constant dense<0.000000e+00> : vector<8x128xf32>
    %127 = tpu.matmul %125, %126, %cst_53 {dimension_numbers = #tpu.dot_dimension_numbers<[1], [0], [0], [1], [0, 0, 1, 1], [], []>} : vector<8x256xbf16>, vector<256x128xbf16>, vector<8x128xf32> -> vector<8x128xf32>
    %cst_54 = arith.constant dense<0.000000e+00> : vector<128xf32>
    %128 = vector.multi_reduction <add>, %127, %cst_54 [0] : vector<8x128xf32> to vector<128xf32>
    %129 = vector.shape_cast %128 : vector<128xf32> to vector<1x128xf32>
    %cst_55 = arith.constant 1.250000e-01 : f32
    %130 = vector.broadcast %cst_55 : f32 to vector<1x128xf32>
    %131 = arith.mulf %129, %130 : vector<1x128xf32>
    %132 = arith.mulf %127, %127 : vector<8x128xf32>
    %cst_56 = arith.constant dense<0.000000e+00> : vector<128xf32>
    %133 = vector.multi_reduction <add>, %132, %cst_56 [0] : vector<8x128xf32> to vector<128xf32>
    %134 = vector.shape_cast %133 : vector<128xf32> to vector<1x128xf32>
    %cst_57 = arith.constant 1.250000e-01 : f32
    %135 = vector.broadcast %cst_57 : f32 to vector<1x128xf32>
    %136 = arith.mulf %134, %135 : vector<1x128xf32>
    %c0_58 = arith.constant 0 : index
    %c2944 = arith.constant 2944 : index
    %137 = vector.load %arg3[%c0_58, %c2944] : memref<1x3456xf32, #tpu.memory_space<vmem>>, vector<1x128xf32>
    %138 = arith.mulf %131, %131 : vector<1x128xf32>
    %139 = arith.subf %136, %138 : vector<1x128xf32>
    %cst_59 = arith.constant 9.99999974E-6 : f32
    %140 = vector.broadcast %cst_59 : f32 to vector<1x128xf32>
    %141 = arith.addf %139, %140 : vector<1x128xf32>
    %142 = math.rsqrt %141 : vector<1x128xf32>
    %143 = arith.mulf %137, %142 : vector<1x128xf32>
    %144 = vector.broadcast %143 : vector<1x128xf32> to vector<8x128xf32>
    %145 = arith.mulf %127, %144 : vector<8x128xf32>
    %c0_60 = arith.constant 0 : index
    %c3072 = arith.constant 3072 : index
    %146 = vector.load %arg3[%c0_60, %c3072] : memref<1x3456xf32, #tpu.memory_space<vmem>>, vector<1x128xf32>
    %147 = arith.mulf %131, %143 : vector<1x128xf32>
    %148 = arith.subf %146, %147 : vector<1x128xf32>
    %149 = vector.broadcast %148 : vector<1x128xf32> to vector<8x128xf32>
    %150 = arith.addf %145, %149 : vector<8x128xf32>
    %cst_61 = arith.constant 0.000000e+00 : f32
    %151 = vector.broadcast %cst_61 : f32 to vector<8x128xf32>
    %152 = arith.maximumf %150, %151 : vector<8x128xf32>
    %153 = arith.truncf %152 : vector<8x128xf32> to vector<8x128xbf16>
    %c0_62 = arith.constant 0 : index
    %c0_63 = arith.constant 0 : index
    %154 = vector.load %arg11[%c0_62, %c0_63] : memref<128x4xbf16, #tpu.memory_space<vmem>>, vector<128x4xbf16>
    %cst_64 = arith.constant dense<0.000000e+00> : vector<8x4xf32>
    %155 = tpu.matmul %153, %154, %cst_64 {dimension_numbers = #tpu.dot_dimension_numbers<[1], [0], [0], [1], [0, 0, 1, 1], [], []>} : vector<8x128xbf16>, vector<128x4xbf16>, vector<8x4xf32> -> vector<8x4xf32>
    %cst_65 = arith.constant dense<0.000000e+00> : vector<4xf32>
    %156 = vector.multi_reduction <add>, %155, %cst_65 [0] : vector<8x4xf32> to vector<4xf32>
    %157 = vector.shape_cast %156 : vector<4xf32> to vector<1x4xf32>
    %cst_66 = arith.constant 1.250000e-01 : f32
    %158 = vector.broadcast %cst_66 : f32 to vector<1x4xf32>
    %159 = arith.mulf %157, %158 : vector<1x4xf32>
    %160 = arith.mulf %155, %155 : vector<8x4xf32>
    %cst_67 = arith.constant dense<0.000000e+00> : vector<4xf32>
    %161 = vector.multi_reduction <add>, %160, %cst_67 [0] : vector<8x4xf32> to vector<4xf32>
    %162 = vector.shape_cast %161 : vector<4xf32> to vector<1x4xf32>
    %cst_68 = arith.constant 1.250000e-01 : f32
    %163 = vector.broadcast %cst_68 : f32 to vector<1x4xf32>
    %164 = arith.mulf %162, %163 : vector<1x4xf32>
    %c0_69 = arith.constant 0 : index
    %c3200 = arith.constant 3200 : index
    %165 = vector.load %arg3[%c0_69, %c3200] : memref<1x3456xf32, #tpu.memory_space<vmem>>, vector<1x4xf32>
    %166 = arith.mulf %159, %159 : vector<1x4xf32>
    %167 = arith.subf %164, %166 : vector<1x4xf32>
    %cst_70 = arith.constant 9.99999974E-6 : f32
    %168 = vector.broadcast %cst_70 : f32 to vector<1x4xf32>
    %169 = arith.addf %167, %168 : vector<1x4xf32>
    %170 = math.rsqrt %169 : vector<1x4xf32>
    %171 = arith.mulf %165, %170 : vector<1x4xf32>
    %172 = vector.broadcast %171 : vector<1x4xf32> to vector<8x4xf32>
    %173 = arith.mulf %155, %172 : vector<8x4xf32>
    %c0_71 = arith.constant 0 : index
    %c3328 = arith.constant 3328 : index
    %174 = vector.load %arg3[%c0_71, %c3328] : memref<1x3456xf32, #tpu.memory_space<vmem>>, vector<1x4xf32>
    %175 = arith.mulf %159, %171 : vector<1x4xf32>
    %176 = arith.subf %174, %175 : vector<1x4xf32>
    %177 = vector.broadcast %176 : vector<1x4xf32> to vector<8x4xf32>
    %178 = arith.addf %173, %177 : vector<8x4xf32>
    %cst_72 = arith.constant dense<0xFF800000> : vector<8xf32>
    %179 = vector.multi_reduction <maximumf>, %178, %cst_72 [1] : vector<8x4xf32> to vector<8xf32>
    %180 = vector.shape_cast %179 : vector<8xf32> to vector<8x1xf32>
    %181 = vector.broadcast %180 : vector<8x1xf32> to vector<8x4xf32>
    %182 = arith.subf %178, %181 : vector<8x4xf32>
    %183 = math.exp %182 : vector<8x4xf32>
    %cst_73 = arith.constant dense<0.000000e+00> : vector<8xf32>
    %184 = vector.multi_reduction <add>, %183, %cst_73 [1] : vector<8x4xf32> to vector<8xf32>
    %185 = vector.shape_cast %184 : vector<8xf32> to vector<8x1xf32>
    %186 = tpu.reciprocal %185 {approx = true} : vector<8x1xf32> -> vector<8x1xf32>
    %187 = vector.broadcast %186 : vector<8x1xf32> to vector<8x4xf32>
    %188 = arith.mulf %183, %187 : vector<8x4xf32>
    %c0_74 = arith.constant 0 : index
    %c0_75 = arith.constant 0 : index
    %189 = vector.load %arg12[%c0_74, %c0_75] : memref<8x128xf32, #tpu.memory_space<vmem>>, vector<8x32xf32>
    tpu.vector_store %arg12[%c0_74, %c0_75], %92 {strides = array<i32>} : memref<8x128xf32, #tpu.memory_space<vmem>>, vector<8x32xf32>,
    %c0_76 = arith.constant 0 : index
    %c32 = arith.constant 32 : index
    %190 = vector.load %arg12[%c0_76, %c32] : memref<8x128xf32, #tpu.memory_space<vmem>>, vector<8x32xf32>
    tpu.vector_store %arg12[%c0_76, %c32], %90 {strides = array<i32>} : memref<8x128xf32, #tpu.memory_space<vmem>>, vector<8x32xf32>,
    %c0_77 = arith.constant 0 : index
    %c64 = arith.constant 64 : index
    %191 = vector.load %arg12[%c0_77, %c64] : memref<8x128xf32, #tpu.memory_space<vmem>>, vector<8x4xf32>
    tpu.vector_store %arg12[%c0_77, %c64], %188 {strides = array<i32>} : memref<8x128xf32, #tpu.memory_space<vmem>>, vector<8x4xf32>,
    %cst_78 = arith.constant 0.000000e+00 : f32
    %192 = vector.broadcast %cst_78 : f32 to vector<8x60xf32>
    %c0_79 = arith.constant 0 : index
    %c68 = arith.constant 68 : index
    %193 = vector.load %arg12[%c0_79, %c68] : memref<8x128xf32, #tpu.memory_space<vmem>>, vector<8x60xf32>
    tpu.vector_store %arg12[%c0_79, %c68], %192 {strides = array<i32>} : memref<8x128xf32, #tpu.memory_space<vmem>>, vector<8x60xf32>,
    return
  }
}

</mosaic_0001>

<llo_original>
// kernel: slip_detect_global_lstm_forward.1
$region0: #{slip_detect_global_lstm_forward.1}
  #allocation0 [shape = 'u32[]', space=smem, size = 0x4, offset = 0x4, fixed_abs, tag = 'smem constant byte address 0x4 - core index']
  #allocation1 [shape = 'u32[144,128]{1,0:T(1,128)}', space=vmem, size = 0x12000, scoped, tag = 'internal scratch']
  %s0 = inlined_call_operand.vmem [shape: f32[8,64], index: 0, kind: input, shape index: {}]
  %s1 = inlined_call_operand.vmem [shape: f32[8,32], index: 1, kind: input, shape index: {}]
  %s2 = inlined_call_operand.vmem [shape: f32[8,32], index: 2, kind: input, shape index: {}]
  %s3 = inlined_call_operand.vmem [shape: f32[1,3456], index: 3, kind: input, shape index: {}]
  %s4 = inlined_call_operand.vmem [shape: bf16[64,1024], index: 4, kind: input, shape index: {}]
  %s5 = inlined_call_operand.vmem [shape: bf16[1024,32], index: 5, kind: input, shape index: {}]
  %s6 = inlined_call_operand.vmem [shape: bf16[32,128], index: 6, kind: input, shape index: {}]
  %s7 = inlined_call_operand.vmem [shape: bf16[32,128], index: 7, kind: input, shape index: {}]
  %s8 = inlined_call_operand.vmem [shape: bf16[32,256], index: 8, kind: input, shape index: {}]
  %s9 = inlined_call_operand.vmem [shape: bf16[32,256], index: 9, kind: input, shape index: {}]
  %s10 = inlined_call_operand.vmem [shape: bf16[256,128], index: 10, kind: input, shape index: {}]
  %s11 = inlined_call_operand.vmem [shape: bf16[128,4], index: 11, kind: input, shape index: {}]
  %s12 = inlined_call_operand.vmem [shape: f32[8,128], index: 12, kind: output, shape index: {}]
  %s13 = sld [smem:[#allocation0]]
  $region58: #{slip_detect_global_lstm_forward.1} parent=0
    _
  %s15 = ssub.s32 1, %s13
  %s16 = scalar_select 0, %s15, %s13
  // Predicated region
  $region2: #{slip_detect_global_lstm_forward.1} parent=0 // pred_check
    _
  $region3: #{slip_detect_global_lstm_forward.1} parent=0 // pred_check_branch
    %18 = sbr.rel (0) target = $region5
  $region4: #{slip_detect_global_lstm_forward.1} parent=0 // pred_region
    _
  $region5: #{slip_detect_global_lstm_forward.1} parent=0 // pred_fallthru
    _
  // Predicated region
  $region6: #{slip_detect_global_lstm_forward.1} parent=0 // pred_check
    _
  $region7: #{slip_detect_global_lstm_forward.1} parent=0 // pred_check_branch
    %20 = sbr.rel (0) target = $region9
  $region8: #{slip_detect_global_lstm_forward.1} parent=0 // pred_region
    _
  $region9: #{slip_detect_global_lstm_forward.1} parent=0 // pred_fallthru
    _
  // Predicated region
  $region10: #{slip_detect_global_lstm_forward.1} parent=0 // pred_check
    _
  $region11: #{slip_detect_global_lstm_forward.1} parent=0 // pred_check_branch
    %22 = sbr.rel (0) target = $region13
  $region12: #{slip_detect_global_lstm_forward.1} parent=0 // pred_region
    _
  $region13: #{slip_detect_global_lstm_forward.1} parent=0 // pred_fallthru
    _
  // Predicated region
  $region14: #{slip_detect_global_lstm_forward.1} parent=0 // pred_check
    _
  $region15: #{slip_detect_global_lstm_forward.1} parent=0 // pred_check_branch
    %24 = sbr.rel (0) target = $region17
  $region16: #{slip_detect_global_lstm_forward.1} parent=0 // pred_region
    _
  $region17: #{slip_detect_global_lstm_forward.1} parent=0 // pred_fallthru
    _
  // Predicated region
  $region18: #{slip_detect_global_lstm_forward.1} parent=0 // pred_check
    _
  $region19: #{slip_detect_global_lstm_forward.1} parent=0 // pred_check_branch
    %26 = sbr.rel (0) target = $region21
  $region20: #{slip_detect_global_lstm_forward.1} parent=0 // pred_region
    _
  $region21: #{slip_detect_global_lstm_forward.1} parent=0 // pred_fallthru
    _
  // Predicated region
  $region22: #{slip_detect_global_lstm_forward.1} parent=0 // pred_check
    _
  $region23: #{slip_detect_global_lstm_forward.1} parent=0 // pred_check_branch
    %28 = sbr.rel (0) target = $region25
  $region24: #{slip_detect_global_lstm_forward.1} parent=0 // pred_region
    _
  $region25: #{slip_detect_global_lstm_forward.1} parent=0 // pred_fallthru
    _
  // Predicated region
  $region26: #{slip_detect_global_lstm_forward.1} parent=0 // pred_check
    _
  $region27: #{slip_detect_global_lstm_forward.1} parent=0 // pred_check_branch
    %30 = sbr.rel (0) target = $region29
  $region28: #{slip_detect_global_lstm_forward.1} parent=0 // pred_region
    _
  $region29: #{slip_detect_global_lstm_forward.1} parent=0 // pred_fallthru
    _
  // Predicated region
  $region30: #{slip_detect_global_lstm_forward.1} parent=0 // pred_check
    _
  $region31: #{slip_detect_global_lstm_forward.1} parent=0 // pred_check_branch
    %32 = sbr.rel (0) target = $region33
  $region32: #{slip_detect_global_lstm_forward.1} parent=0 // pred_region
    _
  $region33: #{slip_detect_global_lstm_forward.1} parent=0 // pred_fallthru
    _
  // Predicated region
  $region34: #{slip_detect_global_lstm_forward.1} parent=0 // pred_check
    _
  $region35: #{slip_detect_global_lstm_forward.1} parent=0 // pred_check_branch
    %34 = sbr.rel (0) target = $region37
  $region36: #{slip_detect_global_lstm_forward.1} parent=0 // pred_region
    _
  $region37: #{slip_detect_global_lstm_forward.1} parent=0 // pred_fallthru
    _
  // Predicated region
  $region38: #{slip_detect_global_lstm_forward.1} parent=0 // pred_check
    _
  $region39: #{slip_detect_global_lstm_forward.1} parent=0 // pred_check_branch
    %36 = sbr.rel (0) target = $region41
  $region40: #{slip_detect_global_lstm_forward.1} parent=0 // pred_region
    _
  $region41: #{slip_detect_global_lstm_forward.1} parent=0 // pred_fallthru
    _
  // Predicated region
  $region42: #{slip_detect_global_lstm_forward.1} parent=0 // pred_check
    _
  $region43: #{slip_detect_global_lstm_forward.1} parent=0 // pred_check_branch
    %38 = sbr.rel (0) target = $region45
  $region44: #{slip_detect_global_lstm_forward.1} parent=0 // pred_region
    _
  $region45: #{slip_detect_global_lstm_forward.1} parent=0 // pred_fallthru
    _
  // Predicated region
  $region46: #{slip_detect_global_lstm_forward.1} parent=0 // pred_check
    _
  $region47: #{slip_detect_global_lstm_forward.1} parent=0 // pred_check_branch
    %40 = sbr.rel (0) target = $region49
  $region48: #{slip_detect_global_lstm_forward.1} parent=0 // pred_region
    _
  $region49: #{slip_detect_global_lstm_forward.1} parent=0 // pred_fallthru
    _
  %v42 = vld [vmem:[%s0] sm:$0xff]
  %v43 = vld [vmem:[%s1] sm:$0xff]
  %v44 = vld [vmem:[%s2] sm:$0xff]
  %v45 = vpack.c.bf16 %v42, %v42
  %v46 = vld [vmem:[%s4] sm:$0xff]
  %v47 = vld [vmem:[%s4 + $0x8] sm:$0xff]
  %v48 = vld [vmem:[%s4 + $0x10] sm:$0xff]
  %v49 = vld [vmem:[%s4 + $0x18] sm:$0xff]
  %v50 = vld [vmem:[%s4 + $0x20] sm:$0xff]
  %v51 = vld [vmem:[%s4 + $0x28] sm:$0xff]
  %v52 = vld [vmem:[%s4 + $0x30] sm:$0xff]
  %v53 = vld [vmem:[%s4 + $0x38] sm:$0xff]
  %v54 = vld [vmem:[%s4 + $0x40] sm:$0xff]
  %v55 = vld [vmem:[%s4 + $0x48] sm:$0xff]
  %v56 = vld [vmem:[%s4 + $0x50] sm:$0xff]
  %v57 = vld [vmem:[%s4 + $0x58] sm:$0xff]
  %v58 = vld [vmem:[%s4 + $0x60] sm:$0xff]
  %v59 = vld [vmem:[%s4 + $0x68] sm:$0xff]
  %v60 = vld [vmem:[%s4 + $0x70] sm:$0xff]
  %v61 = vld [vmem:[%s4 + $0x78] sm:$0xff]
  %v62 = vld [vmem:[%s4 + $0x80] sm:$0xff]
  %v63 = vld [vmem:[%s4 + $0x88] sm:$0xff]
  %v64 = vld [vmem:[%s4 + $0x90] sm:$0xff]
  %v65 = vld [vmem:[%s4 + $0x98] sm:$0xff]
  %v66 = vld [vmem:[%s4 + $0xa0] sm:$0xff]
  %v67 = vld [vmem:[%s4 + $0xa8] sm:$0xff]
  %v68 = vld [vmem:[%s4 + $0xb0] sm:$0xff]
  %v69 = vld [vmem:[%s4 + $0xb8] sm:$0xff]
  %v70 = vld [vmem:[%s4 + $0xc0] sm:$0xff]
  %v71 = vld [vmem:[%s4 + $0xc8] sm:$0xff]
  %v72 = vld [vmem:[%s4 + $0xd0] sm:$0xff]
  %v73 = vld [vmem:[%s4 + $0xd8] sm:$0xff]
  %v74 = vld [vmem:[%s4 + $0xe0] sm:$0xff]
  %v75 = vld [vmem:[%s4 + $0xe8] sm:$0xff]
  %v76 = vld [vmem:[%s4 + $0xf0] sm:$0xff]
  %v77 = vld [vmem:[%s4 + $0xf8] sm:$0xff]
  %v110 = vunpack.c.l.b16 %v46
  %v111 = vunpack.c.h.b16 %v46
  %v112 = vunpack.c.l.b16 %v47
  %v113 = vunpack.c.h.b16 %v47
  %v114 = vunpack.c.l.b16 %v48
  %v115 = vunpack.c.h.b16 %v48
  %v116 = vunpack.c.l.b16 %v49
  %v117 = vunpack.c.h.b16 %v49
  %v118 = vunpack.c.l.b16 %v50
  %v119 = vunpack.c.h.b16 %v50
  %v120 = vunpack.c.l.b16 %v51
  %v121 = vunpack.c.h.b16 %v51
  %v122 = vunpack.c.l.b16 %v52
  %v123 = vunpack.c.h.b16 %v52
  %v124 = vunpack.c.l.b16 %v53
  %v125 = vunpack.c.h.b16 %v53
  %v126 = vunpack.c.l.b16 %v54
  %v127 = vunpack.c.h.b16 %v54
  %v128 = vunpack.c.l.b16 %v55
  %v129 = vunpack.c.h.b16 %v55
  %v130 = vunpack.c.l.b16 %v56
  %v131 = vunpack.c.h.b16 %v56
  %v132 = vunpack.c.l.b16 %v57
  %v133 = vunpack.c.h.b16 %v57
  %v134 = vunpack.c.l.b16 %v58
  %v135 = vunpack.c.h.b16 %v58
  %v136 = vunpack.c.l.b16 %v59
  %v137 = vunpack.c.h.b16 %v59
  %v138 = vunpack.c.l.b16 %v60
  %v139 = vunpack.c.h.b16 %v60
  %v140 = vunpack.c.l.b16 %v61
  %v141 = vunpack.c.h.b16 %v61
  %v142 = vunpack.c.l.b16 %v62
  %v143 = vunpack.c.h.b16 %v62
  %v144 = vunpack.c.l.b16 %v63
  %v145 = vunpack.c.h.b16 %v63
  %v146 = vunpack.c.l.b16 %v64
  %v147 = vunpack.c.h.b16 %v64
  %v148 = vunpack.c.l.b16 %v65
  %v149 = vunpack.c.h.b16 %v65
  %v150 = vunpack.c.l.b16 %v66
  %v151 = vunpack.c.h.b16 %v66
  %v152 = vunpack.c.l.b16 %v67
  %v153 = vunpack.c.h.b16 %v67
  %v154 = vunpack.c.l.b16 %v68
  %v155 = vunpack.c.h.b16 %v68
  %v156 = vunpack.c.l.b16 %v69
  %v157 = vunpack.c.h.b16 %v69
  %v158 = vunpack.c.l.b16 %v70
  %v159 = vunpack.c.h.b16 %v70
  %v160 = vunpack.c.l.b16 %v71
  %v161 = vunpack.c.h.b16 %v71
  %v162 = vunpack.c.l.b16 %v72
  %v163 = vunpack.c.h.b16 %v72
  %v164 = vunpack.c.l.b16 %v73
  %v165 = vunpack.c.h.b16 %v73
  %v166 = vunpack.c.l.b16 %v74
  %v167 = vunpack.c.h.b16 %v74
  %v168 = vunpack.c.l.b16 %v75
  %v169 = vunpack.c.h.b16 %v75
  %v170 = vunpack.c.l.b16 %v76
  %v171 = vunpack.c.h.b16 %v76
  %v172 = vunpack.c.l.b16 %v77
  %v173 = vunpack.c.h.b16 %v77
  %v174 = vpack.c.b16 %v118, %v110
  %v175 = vpack.c.b16 %v119, %v111
  %v176 = vpack.c.b16 %v120, %v112
  %v177 = vpack.c.b16 %v121, %v113
  %v178 = vpack.c.b16 %v122, %v114
  %v179 = vpack.c.b16 %v123, %v115
  %v180 = vpack.c.b16 %v124, %v116
  %v181 = vpack.c.b16 %v125, %v117
  %v182 = vpack.c.b16 %v134, %v126
  %v183 = vpack.c.b16 %v135, %v127
  %v184 = vpack.c.b16 %v136, %v128
  %v185 = vpack.c.b16 %v137, %v129
  %v186 = vpack.c.b16 %v138, %v130
  %v187 = vpack.c.b16 %v139, %v131
  %v188 = vpack.c.b16 %v140, %v132
  %v189 = vpack.c.b16 %v141, %v133
  %v190 = vpack.c.b16 %v150, %v142
  %v191 = vpack.c.b16 %v151, %v143
  %v192 = vpack.c.b16 %v152, %v144
  %v193 = vpack.c.b16 %v153, %v145
  %v194 = vpack.c.b16 %v154, %v146
  %v195 = vpack.c.b16 %v155, %v147
  %v196 = vpack.c.b16 %v156, %v148
  %v197 = vpack.c.b16 %v157, %v149
  %v198 = vpack.c.b16 %v166, %v158
  %v199 = vpack.c.b16 %v167, %v159
  %v200 = vpack.c.b16 %v168, %v160
  %v201 = vpack.c.b16 %v169, %v161
  %v202 = vpack.c.b16 %v170, %v162
  %v203 = vpack.c.b16 %v171, %v163
  %v204 = vpack.c.b16 %v172, %v164
  %v205 = vpack.c.b16 %v173, %v165
  %vm238 = vcmask 523264
  %v240 = vsel %vm238, %v45, 0
  %242 = vmatprep.subr.bf16.mxu0 %v175
  %243 = vmatpush1.bf16.msra.mxu0 %v174
  %244 = vmatprep.subr.bf16.mxu0 %v183
  %245 = vmatpush1.bf16.msra.mxu0 %v182
  %246 = vmatprep.subr.bf16.mxu0 %v191
  %247 = vmatpush1.bf16.msra.mxu0 %v190
  %248 = vmatprep.subr.bf16.mxu0 %v199
  %249 = vmatpush1.bf16.msra.mxu0 %v198
  %250 = vmatprep.subr.bf16.mxu0 0
  %251 = vmatpush1.bf16.msra.mxu0 0
  %252 = vmatprep.subr.bf16.mxu0 0
  %253 = vmatpush1.bf16.msra.mxu0 0
  %254 = vmatprep.subr.bf16.mxu0 0
  %255 = vmatpush1.bf16.msra.mxu0 0
  %256 = vmatprep.subr.bf16.mxu0 0
  %257 = vmatpush1.bf16.msra.mxu0 0
  %258 = vmatprep.subr.bf16.mxu0 0
  %259 = vmatpush1.bf16.msra.mxu0 0
  %260 = vmatprep.subr.bf16.mxu0 0
  %261 = vmatpush1.bf16.msra.mxu0 0
  %262 = vmatprep.subr.bf16.mxu0 0
  %263 = vmatpush1.bf16.msra.mxu0 0
  %264 = vmatprep.subr.bf16.mxu0 0
  %265 = vmatpush1.bf16.msra.mxu0 0
  %266 = vmatprep.subr.bf16.mxu0 0
  %267 = vmatpush1.bf16.msra.mxu0 0
  %268 = vmatprep.subr.bf16.mxu0 0
  %269 = vmatpush1.bf16.msra.mxu0 0
  %270 = vmatprep.subr.bf16.mxu0 0
  %271 = vmatpush1.bf16.msra.mxu0 0
  %272 = vmatprep.subr.bf16.mxu0 0
  %273 = vmatpush1.bf16.msra.mxu0 0
  %274 = vmatprep.mubr.bf16.mxu0 0
  %275 = vmatmul.mubr.bf16.gmra.mrb[0].mxu0 %v240
  %v276 = vpop.f32.mrb[0].mxu0
  %v277 = vadd.f32 0.0, %v276
  %v278 = vpop.f32.mrb[0].mxu0
  %v279 = vadd.f32 0.0, %v278
  %v280 = vpop.f32.mrb[0].mxu0
  %v281 = vpop.f32.mrb[0].mxu0
  %282 = vdwg.mxu0
  %283 = vmatprep.subr.bf16.mxu0 %v177
  %284 = vmatpush1.bf16.msra.mxu0 %v176
  %285 = vmatprep.subr.bf16.mxu0 %v185
  %286 = vmatpush1.bf16.msra.mxu0 %v184
  %287 = vmatprep.subr.bf16.mxu0 %v193
  %288 = vmatpush1.bf16.msra.mxu0 %v192
  %289 = vmatprep.subr.bf16.mxu0 %v201
  %290 = vmatpush1.bf16.msra.mxu0 %v200
  %291 = vmatprep.subr.bf16.mxu0 0
  %292 = vmatpush1.bf16.msra.mxu0 0
  %293 = vmatprep.subr.bf16.mxu0 0
  %294 = vmatpush1.bf16.msra.mxu0 0
  %295 = vmatprep.subr.bf16.mxu0 0
  %296 = vmatpush1.bf16.msra.mxu0 0
  %297 = vmatprep.subr.bf16.mxu0 0
  %298 = vmatpush1.bf16.msra.mxu0 0
  %299 = vmatprep.subr.bf16.mxu0 0
  %300 = vmatpush1.bf16.msra.mxu0 0
  %301 = vmatprep.subr.bf16.mxu0 0
  %302 = vmatpush1.bf16.msra.mxu0 0
  %303 = vmatprep.subr.bf16.mxu0 0
  %304 = vmatpush1.bf16.msra.mxu0 0
  %305 = vmatprep.subr.bf16.mxu0 0
  %306 = vmatpush1.bf16.msra.mxu0 0
  %307 = vmatprep.subr.bf16.mxu0 0
  %308 = vmatpush1.bf16.msra.mxu0 0
  %309 = vmatprep.subr.bf16.mxu0 0
  %310 = vmatpush1.bf16.msra.mxu0 0
  %311 = vmatprep.subr.bf16.mxu0 0
  %312 = vmatpush1.bf16.msra.mxu0 0
  %313 = vmatprep.subr.bf16.mxu0 0
  %314 = vmatpush1.bf16.msra.mxu0 0
  %315 = vmatprep.mubr.bf16.mxu0 0
  %316 = vmatmul.mubr.bf16.gmra.mrb[0].mxu0 %v240
  %v317 = vpop.f32.mrb[0].mxu0
  %v318 = vadd.f32 0.0, %v317
  %v319 = vpop.f32.mrb[0].mxu0
  %v320 = vadd.f32 0.0, %v319
  %v321 = vpop.f32.mrb[0].mxu0
  %v322 = vpop.f32.mrb[0].mxu0
  %323 = vdwg.mxu0
  %324 = vmatprep.subr.bf16.mxu0 %v179
  %325 = vmatpush1.bf16.msra.mxu0 %v178
  %326 = vmatprep.subr.bf16.mxu0 %v187
  %327 = vmatpush1.bf16.msra.mxu0 %v186
  %328 = vmatprep.subr.bf16.mxu0 %v195
  %329 = vmatpush1.bf16.msra.mxu0 %v194
  %330 = vmatprep.subr.bf16.mxu0 %v203
  %331 = vmatpush1.bf16.msra.mxu0 %v202
  %332 = vmatprep.subr.bf16.mxu0 0
  %333 = vmatpush1.bf16.msra.mxu0 0
  %334 = vmatprep.subr.bf16.mxu0 0
  %335 = vmatpush1.bf16.msra.mxu0 0
  %336 = vmatprep.subr.bf16.mxu0 0
  %337 = vmatpush1.bf16.msra.mxu0 0
  %338 = vmatprep.subr.bf16.mxu0 0
  %339 = vmatpush1.bf16.msra.mxu0 0
  %340 = vmatprep.subr.bf16.mxu0 0
  %341 = vmatpush1.bf16.msra.mxu0 0
  %342 = vmatprep.subr.bf16.mxu0 0
  %343 = vmatpush1.bf16.msra.mxu0 0
  %344 = vmatprep.subr.bf16.mxu0 0
  %345 = vmatpush1.bf16.msra.mxu0 0
  %346 = vmatprep.subr.bf16.mxu0 0
  %347 = vmatpush1.bf16.msra.mxu0 0
  %348 = vmatprep.subr.bf16.mxu0 0
  %349 = vmatpush1.bf16.msra.mxu0 0
  %350 = vmatprep.subr.bf16.mxu0 0
  %351 = vmatpush1.bf16.msra.mxu0 0
  %352 = vmatprep.subr.bf16.mxu0 0
  %353 = vmatpush1.bf16.msra.mxu0 0
  %354 = vmatprep.subr.bf16.mxu0 0
  %355 = vmatpush1.bf16.msra.mxu0 0
  %356 = vmatprep.mubr.bf16.mxu0 0
  %357 = vmatmul.mubr.bf16.gmra.mrb[0].mxu0 %v240
  %v358 = vpop.f32.mrb[0].mxu0
  %v359 = vadd.f32 0.0, %v358
  %v360 = vpop.f32.mrb[0].mxu0
  %v361 = vadd.f32 0.0, %v360
  %v362 = vpop.f32.mrb[0].mxu0
  %v363 = vpop.f32.mrb[0].mxu0
  %364 = vdwg.mxu0
  %365 = vmatprep.subr.bf16.mxu0 %v181
  %366 = vmatpush1.bf16.msra.mxu0 %v180
  %367 = vmatprep.subr.bf16.mxu0 %v189
  %368 = vmatpush1.bf16.msra.mxu0 %v188
  %369 = vmatprep.subr.bf16.mxu0 %v197
  %370 = vmatpush1.bf16.msra.mxu0 %v196
  %371 = vmatprep.subr.bf16.mxu0 %v205
  %372 = vmatpush1.bf16.msra.mxu0 %v204
  %373 = vmatprep.subr.bf16.mxu0 0
  %374 = vmatpush1.bf16.msra.mxu0 0
  %375 = vmatprep.subr.bf16.mxu0 0
  %376 = vmatpush1.bf16.msra.mxu0 0
  %377 = vmatprep.subr.bf16.mxu0 0
  %378 = vmatpush1.bf16.msra.mxu0 0
  %379 = vmatprep.subr.bf16.mxu0 0
  %380 = vmatpush1.bf16.msra.mxu0 0
  %381 = vmatprep.subr.bf16.mxu0 0
  %382 = vmatpush1.bf16.msra.mxu0 0
  %383 = vmatprep.subr.bf16.mxu0 0
  %384 = vmatpush1.bf16.msra.mxu0 0
  %385 = vmatprep.subr.bf16.mxu0 0
  %386 = vmatpush1.bf16.msra.mxu0 0
  %387 = vmatprep.subr.bf16.mxu0 0
  %388 = vmatpush1.bf16.msra.mxu0 0
  %389 = vmatprep.subr.bf16.mxu0 0
  %390 = vmatpush1.bf16.msra.mxu0 0
  %391 = vmatprep.subr.bf16.mxu0 0
  %392 = vmatpush1.bf16.msra.mxu0 0
  %393 = vmatprep.subr.bf16.mxu0 0
  %394 = vmatpush1.bf16.msra.mxu0 0
  %395 = vmatprep.subr.bf16.mxu0 0
  %396 = vmatpush1.bf16.msra.mxu0 0
  %397 = vmatprep.mubr.bf16.mxu0 0
  %398 = vmatmul.mubr.bf16.gmra.mrb[0].mxu0 %v240
  %v399 = vpop.f32.mrb[0].mxu0
  %v400 = vadd.f32 0.0, %v399
  %v401 = vpop.f32.mrb[0].mxu0
  %v402 = vadd.f32 0.0, %v401
  %v403 = vpop.f32.mrb[0].mxu0
  %v404 = vpop.f32.mrb[0].mxu0
  %405 = vdwg.mxu0
  %v406 = vrot.slane %v277, 4
  %v407 = vadd.f32 %v277, %v406
  %v408 = vrot.slane %v407, 2
  %v409 = vadd.f32 %v407, %v408
  %v410 = vrot.slane %v409, 1
  %v411 = vadd.f32 %v409, %v410
  %v412 = vrot.slane %v279, 4
  %v413 = vadd.f32 %v279, %v412
  %v414 = vrot.slane %v413, 2
  %v415 = vadd.f32 %v413, %v414
  %v416 = vrot.slane %v415, 1
  %v417 = vadd.f32 %v415, %v416
  %v418 = vrot.slane %v318, 4
  %v419 = vadd.f32 %v318, %v418
  %v420 = vrot.slane %v419, 2
  %v421 = vadd.f32 %v419, %v420
  %v422 = vrot.slane %v421, 1
  %v423 = vadd.f32 %v421, %v422
  %v424 = vrot.slane %v320, 4
  %v425 = vadd.f32 %v320, %v424
  %v426 = vrot.slane %v425, 2
  %v427 = vadd.f32 %v425, %v426
  %v428 = vrot.slane %v427, 1
  %v429 = vadd.f32 %v427, %v428
  %v430 = vrot.slane %v359, 4
  %v431 = vadd.f32 %v359, %v430
  %v432 = vrot.slane %v431, 2
  %v433 = vadd.f32 %v431, %v432
  %v434 = vrot.slane %v433, 1
  %v435 = vadd.f32 %v433, %v434
  %v436 = vrot.slane %v361, 4
  %v437 = vadd.f32 %v361, %v436
  %v438 = vrot.slane %v437, 2
  %v439 = vadd.f32 %v437, %v438
  %v440 = vrot.slane %v439, 1
  %v441 = vadd.f32 %v439, %v440
  %v442 = vrot.slane %v400, 4
  %v443 = vadd.f32 %v400, %v442
  %v444 = vrot.slane %v443, 2
  %v445 = vadd.f32 %v443, %v444
  %v446 = vrot.slane %v445, 1
  %v447 = vadd.f32 %v445, %v446
  %v448 = vrot.slane %v402, 4
  %v449 = vadd.f32 %v402, %v448
  %v450 = vrot.slane %v449, 2
  %v451 = vadd.f32 %v449, %v450
  %v452 = vrot.slane %v451, 1
  %v453 = vadd.f32 %v451, %v452
  %v454 = vmul.f32 %v411, 0.125
  %v455 = vmul.f32 %v417, 0.125
  %v456 = vmul.f32 %v423, 0.125
  %v457 = vmul.f32 %v429, 0.125
  %v458 = vmul.f32 %v435, 0.125
  %v459 = vmul.f32 %v441, 0.125
  %v460 = vmul.f32 %v447, 0.125
  %v461 = vmul.f32 %v453, 0.125
  %v462 = vmul.f32 %v277, %v277
  %v463 = vmul.f32 %v279, %v279
  %v464 = vmul.f32 %v318, %v318
  %v465 = vmul.f32 %v320, %v320
  %v466 = vmul.f32 %v359, %v359
  %v467 = vmul.f32 %v361, %v361
  %v468 = vmul.f32 %v400, %v400
  %v469 = vmul.f32 %v402, %v402
  %v470 = vrot.slane %v462, 4
  %v471 = vadd.f32 %v462, %v470
  %v472 = vrot.slane %v471, 2
  %v473 = vadd.f32 %v471, %v472
  %v474 = vrot.slane %v473, 1
  %v475 = vadd.f32 %v473, %v474
  %v476 = vrot.slane %v463, 4
  %v477 = vadd.f32 %v463, %v476
  %v478 = vrot.slane %v477, 2
  %v479 = vadd.f32 %v477, %v478
  %v480 = vrot.slane %v479, 1
  %v481 = vadd.f32 %v479, %v480
  %v482 = vrot.slane %v464, 4
  %v483 = vadd.f32 %v464, %v482
  %v484 = vrot.slane %v483, 2
  %v485 = vadd.f32 %v483, %v484
  %v486 = vrot.slane %v485, 1
  %v487 = vadd.f32 %v485, %v486
  %v488 = vrot.slane %v465, 4
  %v489 = vadd.f32 %v465, %v488
  %v490 = vrot.slane %v489, 2
  %v491 = vadd.f32 %v489, %v490
  %v492 = vrot.slane %v491, 1
  %v493 = vadd.f32 %v491, %v492
  %v494 = vrot.slane %v466, 4
  %v495 = vadd.f32 %v466, %v494
  %v496 = vrot.slane %v495, 2
  %v497 = vadd.f32 %v495, %v496
  %v498 = vrot.slane %v497, 1
  %v499 = vadd.f32 %v497, %v498
  %v500 = vrot.slane %v467, 4
  %v501 = vadd.f32 %v467, %v500
  %v502 = vrot.slane %v501, 2
  %v503 = vadd.f32 %v501, %v502
  %v504 = vrot.slane %v503, 1
  %v505 = vadd.f32 %v503, %v504
  %v506 = vrot.slane %v468, 4
  %v507 = vadd.f32 %v468, %v506
  %v508 = vrot.slane %v507, 2
  %v509 = vadd.f32 %v507, %v508
  %v510 = vrot.slane %v509, 1
  %v511 = vadd.f32 %v509, %v510
  %v512 = vrot.slane %v469, 4
  %v513 = vadd.f32 %v469, %v512
  %v514 = vrot.slane %v513, 2
  %v515 = vadd.f32 %v513, %v514
  %v516 = vrot.slane %v515, 1
  %v517 = vadd.f32 %v515, %v516
  %v518 = vmul.f32 %v475, 0.125
  %v519 = vmul.f32 %v481, 0.125
  %v520 = vmul.f32 %v487, 0.125
  %v521 = vmul.f32 %v493, 0.125
  %v522 = vmul.f32 %v499, 0.125
  %v523 = vmul.f32 %v505, 0.125
  %v524 = vmul.f32 %v511, 0.125
  %v525 = vmul.f32 %v517, 0.125
  %v526 = vld [vmem:[%s3] sm:$0xff]
  %v527 = vmul.f32 %v454, %v454
  %v528 = vmul.f32 %v455, %v455
  %v529 = vmul.f32 %v456, %v456
  %v530 = vmul.f32 %v457, %v457
  %v531 = vmul.f32 %v458, %v458
  %v532 = vmul.f32 %v459, %v459
  %v533 = vmul.f32 %v460, %v460
  %v534 = vmul.f32 %v461, %v461
  %v535 = vsub.f32 %v518, %v527
  %v536 = vsub.f32 %v519, %v528
  %v537 = vsub.f32 %v520, %v529
  %v538 = vsub.f32 %v521, %v530
  %v539 = vsub.f32 %v522, %v531
  %v540 = vsub.f32 %v523, %v532
  %v541 = vsub.f32 %v524, %v533
  %v542 = vsub.f32 %v525, %v534
  %v543 = vadd.f32 %v535, 1e-05
  %v544 = vadd.f32 %v536, 1e-05
  %v545 = vadd.f32 %v537, 1e-05
  %v546 = vadd.f32 %v538, 1e-05
  %v547 = vadd.f32 %v539, 1e-05
  %v548 = vadd.f32 %v540, 1e-05
  %v549 = vadd.f32 %v541, 1e-05
  %v550 = vadd.f32 %v542, 1e-05
  %v551 = vrsqrt.pop %v543
  %v552 = vrsqrt.pop %v544
  %v553 = vrsqrt.pop %v545
  %v554 = vrsqrt.pop %v546
  %v555 = vrsqrt.pop %v547
  %v556 = vrsqrt.pop %v548
  %v557 = vrsqrt.pop %v549
  %v558 = vrsqrt.pop %v550
  %v567 = vcombine.low %v551, %v552
  %v568 = vcombine.low %v553, %v554
  %v569 = vcombine.low %v555, %v556
  %v570 = vcombine.low %v557, %v558
  %v572 = vunpack.c.l.s4 1966171168
  %v573 = vunpack.c.0.s8 %v572
  %v574 = vlaneseq
  %v575 = vshrl.u32 %v574, 7
  %v576 = vsub.s32 %v573, %v575
  %v577 = vrot.slane %v567, %v576
  %v579 = vunpack.c.l.s4 1966171168
  %v580 = vunpack.c.0.s8 %v579
  %v581 = vlaneseq
  %v582 = vshrl.u32 %v581, 7
  %v583 = vsub.s32 %v580, %v582
  %v584 = vrot.slane %v568, %v583
  %v586 = vunpack.c.l.s4 1966171168
  %v587 = vunpack.c.0.s8 %v586
  %v588 = vlaneseq
  %v589 = vshrl.u32 %v588, 7
  %v590 = vsub.s32 %v587, %v589
  %v591 = vrot.slane %v569, %v590
  %v593 = vunpack.c.l.s4 1966171168
  %v594 = vunpack.c.0.s8 %v593
  %v595 = vlaneseq
  %v596 = vshrl.u32 %v595, 7
  %v597 = vsub.s32 %v594, %v596
  %v598 = vrot.slane %v570, %v597
  %v599 = vcombine.low %v577, %v584
  %v600 = vcombine.low %v591, %v598
  %v602 = vunpack.c.l.s4 1966171168
  %v603 = vunpack.c.0.s8 %v602
  %v604 = vlaneseq
  %v605 = vshrl.u32 %v604, 7
  %v606 = vsub.s32 %v603, %v605
  %v607 = vrot.slane %v599, %v606
  %v609 = vunpack.c.l.s4 1966171168
  %v610 = vunpack.c.0.s8 %v609
  %v611 = vlaneseq
  %v612 = vshrl.u32 %v611, 7
  %v613 = vsub.s32 %v610, %v612
  %v614 = vrot.slane %v600, %v613
  %v615 = vcombine.low %v607, %v614
  %v617 = vmul.f32 %v526, %v615
  %v619 = vlaneseq
  %v620 = vshrl.u32 %v619, 7
  %v621 = vsub.s32 0, %v620
  %v622 = vrot.slane %v617, %v621
  %v623 = vlaneseq
  %v624 = vshrl.u32 %v623, 7
  %v625 = vsub.s32 1, %v624
  %v626 = vrot.slane %v617, %v625
  %v627 = vlaneseq
  %v628 = vshrl.u32 %v627, 7
  %v629 = vsub.s32 2, %v628
  %v630 = vrot.slane %v617, %v629
  %v631 = vlaneseq
  %v632 = vshrl.u32 %v631, 7
  %v633 = vsub.s32 3, %v632
  %v634 = vrot.slane %v617, %v633
  %v635 = vlaneseq
  %v636 = vshrl.u32 %v635, 7
  %v637 = vsub.s32 4, %v636
  %v638 = vrot.slane %v617, %v637
  %v639 = vlaneseq
  %v640 = vshrl.u32 %v639, 7
  %v641 = vsub.s32 5, %v640
  %v642 = vrot.slane %v617, %v641
  %v643 = vlaneseq
  %v644 = vshrl.u32 %v643, 7
  %v645 = vsub.s32 6, %v644
  %v646 = vrot.slane %v617, %v645
  %v647 = vlaneseq
  %v648 = vshrl.u32 %v647, 7
  %v649 = vsub.s32 7, %v648
  %v650 = vrot.slane %v617, %v649
  %v659 = vmul.f32 %v277, %v622
  %v660 = vmul.f32 %v279, %v626
  %v661 = vmul.f32 %v318, %v630
  %v662 = vmul.f32 %v320, %v634
  %v663 = vmul.f32 %v359, %v638
  %v664 = vmul.f32 %v361, %v642
  %v665 = vmul.f32 %v400, %v646
  %v666 = vmul.f32 %v402, %v650
  %v667 = vld [vmem:[%s3 + $0x8] sm:$0xff]
  %v668 = vmul.f32 %v454, %v622
  %v669 = vmul.f32 %v455, %v626
  %v670 = vmul.f32 %v456, %v630
  %v671 = vmul.f32 %v457, %v634
  %v672 = vmul.f32 %v458, %v638
  %v673 = vmul.f32 %v459, %v642
  %v674 = vmul.f32 %v460, %v646
  %v675 = vmul.f32 %v461, %v650
  %v684 = vcombine.low %v668, %v669
  %v685 = vcombine.low %v670, %v671
  %v686 = vcombine.low %v672, %v673
  %v687 = vcombine.low %v674, %v675
  %v689 = vunpack.c.l.s4 1966171168
  %v690 = vunpack.c.0.s8 %v689
  %v691 = vlaneseq
  %v692 = vshrl.u32 %v691, 7
  %v693 = vsub.s32 %v690, %v692
  %v694 = vrot.slane %v684, %v693
  %v696 = vunpack.c.l.s4 1966171168
  %v697 = vunpack.c.0.s8 %v696
  %v698 = vlaneseq
  %v699 = vshrl.u32 %v698, 7
  %v700 = vsub.s32 %v697, %v699
  %v701 = vrot.slane %v685, %v700
  %v703 = vunpack.c.l.s4 1966171168
  %v704 = vunpack.c.0.s8 %v703
  %v705 = vlaneseq
  %v706 = vshrl.u32 %v705, 7
  %v707 = vsub.s32 %v704, %v706
  %v708 = vrot.slane %v686, %v707
  %v710 = vunpack.c.l.s4 1966171168
  %v711 = vunpack.c.0.s8 %v710
  %v712 = vlaneseq
  %v713 = vshrl.u32 %v712, 7
  %v714 = vsub.s32 %v711, %v713
  %v715 = vrot.slane %v687, %v714
  %v716 = vcombine.low %v694, %v701
  %v717 = vcombine.low %v708, %v715
  %v719 = vunpack.c.l.s4 1966171168
  %v720 = vunpack.c.0.s8 %v719
  %v721 = vlaneseq
  %v722 = vshrl.u32 %v721, 7
  %v723 = vsub.s32 %v720, %v722
  %v724 = vrot.slane %v716, %v723
  %v726 = vunpack.c.l.s4 1966171168
  %v727 = vunpack.c.0.s8 %v726
  %v728 = vlaneseq
  %v729 = vshrl.u32 %v728, 7
  %v730 = vsub.s32 %v727, %v729
  %v731 = vrot.slane %v717, %v730
  %v732 = vcombine.low %v724, %v731
  %v734 = vsub.f32 %v667, %v732
  %v736 = vlaneseq
  %v737 = vshrl.u32 %v736, 7
  %v738 = vsub.s32 0, %v737
  %v739 = vrot.slane %v734, %v738
  %v740 = vlaneseq
  %v741 = vshrl.u32 %v740, 7
  %v742 = vsub.s32 1, %v741
  %v743 = vrot.slane %v734, %v742
  %v744 = vlaneseq
  %v745 = vshrl.u32 %v744, 7
  %v746 = vsub.s32 2, %v745
  %v747 = vrot.slane %v734, %v746
  %v748 = vlaneseq
  %v749 = vshrl.u32 %v748, 7
  %v750 = vsub.s32 3, %v749
  %v751 = vrot.slane %v734, %v750
  %v752 = vlaneseq
  %v753 = vshrl.u32 %v752, 7
  %v754 = vsub.s32 4, %v753
  %v755 = vrot.slane %v734, %v754
  %v756 = vlaneseq
  %v757 = vshrl.u32 %v756, 7
  %v758 = vsub.s32 5, %v757
  %v759 = vrot.slane %v734, %v758
  %v760 = vlaneseq
  %v761 = vshrl.u32 %v760, 7
  %v762 = vsub.s32 6, %v761
  %v763 = vrot.slane %v734, %v762
  %v764 = vlaneseq
  %v765 = vshrl.u32 %v764, 7
  %v766 = vsub.s32 7, %v765
  %v767 = vrot.slane %v734, %v766
  %v776 = vadd.f32 %v659, %v739
  %v777 = vadd.f32 %v660, %v743
  %v778 = vadd.f32 %v661, %v747
  %v779 = vadd.f32 %v662, %v751
  %v780 = vadd.f32 %v663, %v755
  %v781 = vadd.f32 %v664, %v759
  %v782 = vadd.f32 %v665, %v763
  %v783 = vadd.f32 %v666, %v767
  %v784 = vmax.f32 %v776, 0.0
  %v785 = vmax.f32 %v777, 0.0
  %v786 = vmax.f32 %v778, 0.0
  %v787 = vmax.f32 %v779, 0.0
  %v788 = vmax.f32 %v780, 0.0
  %v789 = vmax.f32 %v781, 0.0
  %v790 = vmax.f32 %v782, 0.0
  %v791 = vmax.f32 %v783, 0.0
  %v792 = vpack.c.bf16 %v784, %v784
  %v793 = vpack.c.bf16 %v785, %v785
  %v794 = vpack.c.bf16 %v786, %v786
  %v795 = vpack.c.bf16 %v787, %v787
  %v796 = vpack.c.bf16 %v788, %v788
  %v797 = vpack.c.bf16 %v789, %v789
  %v798 = vpack.c.bf16 %v790, %v790
  %v799 = vpack.c.bf16 %v791, %v791
  %v800 = vld [vmem:[%s5] sm:$0xf]
  %v801 = vld [vmem:[%s5 + $0x4] sm:$0xf]
  %v802 = vld [vmem:[%s5 + $0x8] sm:$0xf]
  %v803 = vld [vmem:[%s5 + $0xc] sm:$0xf]
  %v804 = vld [vmem:[%s5 + $0x10] sm:$0xf]
  %v805 = vld [vmem:[%s5 + $0x14] sm:$0xf]
  %v806 = vld [vmem:[%s5 + $0x18] sm:$0xf]
  %v807 = vld [vmem:[%s5 + $0x1c] sm:$0xf]
  %v808 = vld [vmem:[%s5 + $0x20] sm:$0xf]
  %v809 = vld [vmem:[%s5 + $0x24] sm:$0xf]
  %v810 = vld [vmem:[%s5 + $0x28] sm:$0xf]
  %v811 = vld [vmem:[%s5 + $0x2c] sm:$0xf]
  %v812 = vld [vmem:[%s5 + $0x30] sm:$0xf]
  %v813 = vld [vmem:[%s5 + $0x34] sm:$0xf]
  %v814 = vld [vmem:[%s5 + $0x38] sm:$0xf]
  %v815 = vld [vmem:[%s5 + $0x3c] sm:$0xf]
  %v816 = vld [vmem:[%s5 + $0x40] sm:$0xf]
  %v817 = vld [vmem:[%s5 + $0x44] sm:$0xf]
  %v818 = vld [vmem:[%s5 + $0x48] sm:$0xf]
  %v819 = vld [vmem:[%s5 + $0x4c] sm:$0xf]
  %v820 = vld [vmem:[%s5 + $0x50] sm:$0xf]
  %v821 = vld [vmem:[%s5 + $0x54] sm:$0xf]
  %v822 = vld [vmem:[%s5 + $0x58] sm:$0xf]
  %v823 = vld [vmem:[%s5 + $0x5c] sm:$0xf]
  %v824 = vld [vmem:[%s5 + $0x60] sm:$0xf]
  %v825 = vld [vmem:[%s5 + $0x64] sm:$0xf]
  %v826 = vld [vmem:[%s5 + $0x68] sm:$0xf]
  %v827 = vld [vmem:[%s5 + $0x6c] sm:$0xf]
  %v828 = vld [vmem:[%s5 + $0x70] sm:$0xf]
  %v829 = vld [vmem:[%s5 + $0x74] sm:$0xf]
  %v830 = vld [vmem:[%s5 + $0x78] sm:$0xf]
  %v831 = vld [vmem:[%s5 + $0x7c] sm:$0xf]
  %v832 = vld [vmem:[%s5 + $0x80] sm:$0xf]
  %v833 = vld [vmem:[%s5 + $0x84] sm:$0xf]
  %v834 = vld [vmem:[%s5 + $0x88] sm:$0xf]
  %v835 = vld [vmem:[%s5 + $0x8c] sm:$0xf]
  %v836 = vld [vmem:[%s5 + $0x90] sm:$0xf]
  %v837 = vld [vmem:[%s5 + $0x94] sm:$0xf]
  %v838 = vld [vmem:[%s5 + $0x98] sm:$0xf]
  %v839 = vld [vmem:[%s5 + $0x9c] sm:$0xf]
  %v840 = vld [vmem:[%s5 + $0xa0] sm:$0xf]
  %v841 = vld [vmem:[%s5 + $0xa4] sm:$0xf]
  %v842 = vld [vmem:[%s5 + $0xa8] sm:$0xf]
  %v843 = vld [vmem:[%s5 + $0xac] sm:$0xf]
  %v844 = vld [vmem:[%s5 + $0xb0] sm:$0xf]
  %v845 = vld [vmem:[%s5 + $0xb4] sm:$0xf]
  %v846 = vld [vmem:[%s5 + $0xb8] sm:$0xf]
  %v847 = vld [vmem:[%s5 + $0xbc] sm:$0xf]
  %v848 = vld [vmem:[%s5 + $0xc0] sm:$0xf]
  %v849 = vld [vmem:[%s5 + $0xc4] sm:$0xf]
  %v850 = vld [vmem:[%s5 + $0xc8] sm:$0xf]
  %v851 = vld [vmem:[%s5 + $0xcc] sm:$0xf]
  %v852 = vld [vmem:[%s5 + $0xd0] sm:$0xf]
  %v853 = vld [vmem:[%s5 + $0xd4] sm:$0xf]
  %v854 = vld [vmem:[%s5 + $0xd8] sm:$0xf]
  %v855 = vld [vmem:[%s5 + $0xdc] sm:$0xf]
  %v856 = vld [vmem:[%s5 + $0xe0] sm:$0xf]
  %v857 = vld [vmem:[%s5 + $0xe4] sm:$0xf]
  %v858 = vld [vmem:[%s5 + $0xe8] sm:$0xf]
  %v859 = vld [vmem:[%s5 + $0xec] sm:$0xf]
  %v860 = vld [vmem:[%s5 + $0xf0] sm:$0xf]
  %v861 = vld [vmem:[%s5 + $0xf4] sm:$0xf]
  %v862 = vld [vmem:[%s5 + $0xf8] sm:$0xf]
  %v863 = vld [vmem:[%s5 + $0xfc] sm:$0xf]
  %v864 = vld [vmem:[%s5 + $0x100] sm:$0xf]
  %v865 = vld [vmem:[%s5 + $0x104] sm:$0xf]
  %v866 = vld [vmem:[%s5 + $0x108] sm:$0xf]
  %v867 = vld [vmem:[%s5 + $0x10c] sm:$0xf]
  %v868 = vld [vmem:[%s5 + $0x110] sm:$0xf]
  %v869 = vld [vmem:[%s5 + $0x114] sm:$0xf]
  %v870 = vld [vmem:[%s5 + $0x118] sm:$0xf]
  %v871 = vld [vmem:[%s5 + $0x11c] sm:$0xf]
  %v872 = vld [vmem:[%s5 + $0x120] sm:$0xf]
  %v873 = vld [vmem:[%s5 + $0x124] sm:$0xf]
  %v874 = vld [vmem:[%s5 + $0x128] sm:$0xf]
  %v875 = vld [vmem:[%s5 + $0x12c] sm:$0xf]
  %v876 = vld [vmem:[%s5 + $0x130] sm:$0xf]
  %v877 = vld [vmem:[%s5 + $0x134] sm:$0xf]
  %v878 = vld [vmem:[%s5 + $0x138] sm:$0xf]
  %v879 = vld [vmem:[%s5 + $0x13c] sm:$0xf]
  %v880 = vld [vmem:[%s5 + $0x140] sm:$0xf]
  %v881 = vld [vmem:[%s5 + $0x144] sm:$0xf]
  %v882 = vld [vmem:[%s5 + $0x148] sm:$0xf]
  %v883 = vld [vmem:[%s5 + $0x14c] sm:$0xf]
  %v884 = vld [vmem:[%s5 + $0x150] sm:$0xf]
  %v885 = vld [vmem:[%s5 + $0x154] sm:$0xf]
  %v886 = vld [vmem:[%s5 + $0x158] sm:$0xf]
  %v887 = vld [vmem:[%s5 + $0x15c] sm:$0xf]
  %v888 = vld [vmem:[%s5 + $0x160] sm:$0xf]
  %v889 = vld [vmem:[%s5 + $0x164] sm:$0xf]
  %v890 = vld [vmem:[%s5 + $0x168] sm:$0xf]
  %v891 = vld [vmem:[%s5 + $0x16c] sm:$0xf]
  %v892 = vld [vmem:[%s5 + $0x170] sm:$0xf]
  %v893 = vld [vmem:[%s5 + $0x174] sm:$0xf]
  %v894 = vld [vmem:[%s5 + $0x178] sm:$0xf]
  %v895 = vld [vmem:[%s5 + $0x17c] sm:$0xf]
  %v896 = vld [vmem:[%s5 + $0x180] sm:$0xf]
  %v897 = vld [vmem:[%s5 + $0x184] sm:$0xf]
  %v898 = vld [vmem:[%s5 + $0x188] sm:$0xf]
  %v899 = vld [vmem:[%s5 + $0x18c] sm:$0xf]
  %v900 = vld [vmem:[%s5 + $0x190] sm:$0xf]
  %v901 = vld [vmem:[%s5 + $0x194] sm:$0xf]
  %v902 = vld [vmem:[%s5 + $0x198] sm:$0xf]
  %v903 = vld [vmem:[%s5 + $0x19c] sm:$0xf]
  %v904 = vld [vmem:[%s5 + $0x1a0] sm:$0xf]
  %v905 = vld [vmem:[%s5 + $0x1a4] sm:$0xf]
  %v906 = vld [vmem:[%s5 + $0x1a8] sm:$0xf]
  %v907 = vld [vmem:[%s5 + $0x1ac] sm:$0xf]
  %v908 = vld [vmem:[%s5 + $0x1b0] sm:$0xf]
  %v909 = vld [vmem:[%s5 + $0x1b4] sm:$0xf]
  %v910 = vld [vmem:[%s5 + $0x1b8] sm:$0xf]
  %v911 = vld [vmem:[%s5 + $0x1bc] sm:$0xf]
  %v912 = vld [vmem:[%s5 + $0x1c0] sm:$0xf]
  %v913 = vld [vmem:[%s5 + $0x1c4] sm:$0xf]
  %v914 = vld [vmem:[%s5 + $0x1c8] sm:$0xf]
  %v915 = vld [vmem:[%s5 + $0x1cc] sm:$0xf]
  %v916 = vld [vmem:[%s5 + $0x1d0] sm:$0xf]
  %v917 = vld [vmem:[%s5 + $0x1d4] sm:$0xf]
  %v918 = vld [vmem:[%s5 + $0x1d8] sm:$0xf]
  %v919 = vld [vmem:[%s5 + $0x1dc] sm:$0xf]
  %v920 = vld [vmem:[%s5 + $0x1e0] sm:$0xf]
  %v921 = vld [vmem:[%s5 + $0x1e4] sm:$0xf]
  %v922 = vld [vmem:[%s5 + $0x1e8] sm:$0xf]
  %v923 = vld [vmem:[%s5 + $0x1ec] sm:$0xf]
  %v924 = vld [vmem:[%s5 + $0x1f0] sm:$0xf]
  %v925 = vld [vmem:[%s5 + $0x1f4] sm:$0xf]
  %v926 = vld [vmem:[%s5 + $0x1f8] sm:$0xf]
  %v927 = vld [vmem:[%s5 + $0x1fc] sm:$0xf]
  %v1056 = vunpack.c.l.b16 %v800
  %v1057 = vunpack.c.l.b16 %v801
  %v1058 = vunpack.c.l.b16 %v802
  %v1059 = vunpack.c.l.b16 %v803
  %v1060 = vunpack.c.l.b16 %v804
  %v1061 = vunpack.c.l.b16 %v805
  %v1062 = vunpack.c.l.b16 %v806
  %v1063 = vunpack.c.l.b16 %v807
  %v1064 = vunpack.c.l.b16 %v808
  %v1065 = vunpack.c.l.b16 %v809
  %v1066 = vunpack.c.l.b16 %v810
  %v1067 = vunpack.c.l.b16 %v811
  %v1068 = vunpack.c.l.b16 %v812
  %v1069 = vunpack.c.l.b16 %v813
  %v1070 = vunpack.c.l.b16 %v814
  %v1071 = vunpack.c.l.b16 %v815
  %v1072 = vunpack.c.l.b16 %v816
  %v1073 = vunpack.c.l.b16 %v817
  %v1074 = vunpack.c.l.b16 %v818
  %v1075 = vunpack.c.l.b16 %v819
  %v1076 = vunpack.c.l.b16 %v820
  %v1077 = vunpack.c.l.b16 %v821
  %v1078 = vunpack.c.l.b16 %v822
  %v1079 = vunpack.c.l.b16 %v823
  %v1080 = vunpack.c.l.b16 %v824
  %v1081 = vunpack.c.l.b16 %v825
  %v1082 = vunpack.c.l.b16 %v826
  %v1083 = vunpack.c.l.b16 %v827
  %v1084 = vunpack.c.l.b16 %v828
  %v1085 = vunpack.c.l.b16 %v829
  %v1086 = vunpack.c.l.b16 %v830
  %v1087 = vunpack.c.l.b16 %v831
  %v1088 = vunpack.c.l.b16 %v832
  %v1089 = vunpack.c.l.b16 %v833
  %v1090 = vunpack.c.l.b16 %v834
  %v1091 = vunpack.c.l.b16 %v835
  %v1092 = vunpack.c.l.b16 %v836
  %v1093 = vunpack.c.l.b16 %v837
  %v1094 = vunpack.c.l.b16 %v838
  %v1095 = vunpack.c.l.b16 %v839
  %v1096 = vunpack.c.l.b16 %v840
  %v1097 = vunpack.c.l.b16 %v841
  %v1098 = vunpack.c.l.b16 %v842
  %v1099 = vunpack.c.l.b16 %v843
  %v1100 = vunpack.c.l.b16 %v844
  %v1101 = vunpack.c.l.b16 %v845
  %v1102 = vunpack.c.l.b16 %v846
  %v1103 = vunpack.c.l.b16 %v847
  %v1104 = vunpack.c.l.b16 %v848
  %v1105 = vunpack.c.l.b16 %v849
  %v1106 = vunpack.c.l.b16 %v850
  %v1107 = vunpack.c.l.b16 %v851
  %v1108 = vunpack.c.l.b16 %v852
  %v1109 = vunpack.c.l.b16 %v853
  %v1110 = vunpack.c.l.b16 %v854
  %v1111 = vunpack.c.l.b16 %v855
  %v1112 = vunpack.c.l.b16 %v856
  %v1113 = vunpack.c.l.b16 %v857
  %v1114 = vunpack.c.l.b16 %v858
  %v1115 = vunpack.c.l.b16 %v859
  %v1116 = vunpack.c.l.b16 %v860
  %v1117 = vunpack.c.l.b16 %v861
  %v1118 = vunpack.c.l.b16 %v862
  %v1119 = vunpack.c.l.b16 %v863
  %v1120 = vunpack.c.l.b16 %v864
  %v1121 = vunpack.c.l.b16 %v865
  %v1122 = vunpack.c.l.b16 %v866
  %v1123 = vunpack.c.l.b16 %v867
  %v1124 = vunpack.c.l.b16 %v868
  %v1125 = vunpack.c.l.b16 %v869
  %v1126 = vunpack.c.l.b16 %v870
  %v1127 = vunpack.c.l.b16 %v871
  %v1128 = vunpack.c.l.b16 %v872
  %v1129 = vunpack.c.l.b16 %v873
  %v1130 = vunpack.c.l.b16 %v874
  %v1131 = vunpack.c.l.b16 %v875
  %v1132 = vunpack.c.l.b16 %v876
  %v1133 = vunpack.c.l.b16 %v877
  %v1134 = vunpack.c.l.b16 %v878
  %v1135 = vunpack.c.l.b16 %v879
  %v1136 = vunpack.c.l.b16 %v880
  %v1137 = vunpack.c.l.b16 %v881
  %v1138 = vunpack.c.l.b16 %v882
  %v1139 = vunpack.c.l.b16 %v883
  %v1140 = vunpack.c.l.b16 %v884
  %v1141 = vunpack.c.l.b16 %v885
  %v1142 = vunpack.c.l.b16 %v886
  %v1143 = vunpack.c.l.b16 %v887
  %v1144 = vunpack.c.l.b16 %v888
  %v1145 = vunpack.c.l.b16 %v889
  %v1146 = vunpack.c.l.b16 %v890
  %v1147 = vunpack.c.l.b16 %v891
  %v1148 = vunpack.c.l.b16 %v892
  %v1149 = vunpack.c.l.b16 %v893
  %v1150 = vunpack.c.l.b16 %v894
  %v1151 = vunpack.c.l.b16 %v895
  %v1152 = vunpack.c.l.b16 %v896
  %v1153 = vunpack.c.l.b16 %v897
  %v1154 = vunpack.c.l.b16 %v898
  %v1155 = vunpack.c.l.b16 %v899
  %v1156 = vunpack.c.l.b16 %v900
  %v1157 = vunpack.c.l.b16 %v901
  %v1158 = vunpack.c.l.b16 %v902
  %v1159 = vunpack.c.l.b16 %v903
  %v1160 = vunpack.c.l.b16 %v904
  %v1161 = vunpack.c.l.b16 %v905
  %v1162 = vunpack.c.l.b16 %v906
  %v1163 = vunpack.c.l.b16 %v907
  %v1164 = vunpack.c.l.b16 %v908
  %v1165 = vunpack.c.l.b16 %v909
  %v1166 = vunpack.c.l.b16 %v910
  %v1167 = vunpack.c.l.b16 %v911
  %v1168 = vunpack.c.l.b16 %v912
  %v1169 = vunpack.c.l.b16 %v913
  %v1170 = vunpack.c.l.b16 %v914
  %v1171 = vunpack.c.l.b16 %v915
  %v1172 = vunpack.c.l.b16 %v916
  %v1173 = vunpack.c.l.b16 %v917
  %v1174 = vunpack.c.l.b16 %v918
  %v1175 = vunpack.c.l.b16 %v919
  %v1176 = vunpack.c.l.b16 %v920
  %v1177 = vunpack.c.l.b16 %v921
  %v1178 = vunpack.c.l.b16 %v922
  %v1179 = vunpack.c.l.b16 %v923
  %v1180 = vunpack.c.l.b16 %v924
  %v1181 = vunpack.c.l.b16 %v925
  %v1182 = vunpack.c.l.b16 %v926
  %v1183 = vunpack.c.l.b16 %v927
  %v1184 = vpack.c.b16 %v1057, %v1056
  %v1185 = vpack.c.b16 %v1059, %v1058
  %v1186 = vpack.c.b16 %v1061, %v1060
  %v1187 = vpack.c.b16 %v1063, %v1062
  %v1188 = vpack.c.b16 %v1065, %v1064
  %v1189 = vpack.c.b16 %v1067, %v1066
  %v1190 = vpack.c.b16 %v1069, %v1068
  %v1191 = vpack.c.b16 %v1071, %v1070
  %v1192 = vpack.c.b16 %v1073, %v1072
  %v1193 = vpack.c.b16 %v1075, %v1074
  %v1194 = vpack.c.b16 %v1077, %v1076
  %v1195 = vpack.c.b16 %v1079, %v1078
  %v1196 = vpack.c.b16 %v1081, %v1080
  %v1197 = vpack.c.b16 %v1083, %v1082
  %v1198 = vpack.c.b16 %v1085, %v1084
  %v1199 = vpack.c.b16 %v1087, %v1086
  %v1200 = vpack.c.b16 %v1089, %v1088
  %v1201 = vpack.c.b16 %v1091, %v1090
  %v1202 = vpack.c.b16 %v1093, %v1092
  %v1203 = vpack.c.b16 %v1095, %v1094
  %v1204 = vpack.c.b16 %v1097, %v1096
  %v1205 = vpack.c.b16 %v1099, %v1098
  %v1206 = vpack.c.b16 %v1101, %v1100
  %v1207 = vpack.c.b16 %v1103, %v1102
  %v1208 = vpack.c.b16 %v1105, %v1104
  %v1209 = vpack.c.b16 %v1107, %v1106
  %v1210 = vpack.c.b16 %v1109, %v1108
  %v1211 = vpack.c.b16 %v1111, %v1110
  %v1212 = vpack.c.b16 %v1113, %v1112
  %v1213 = vpack.c.b16 %v1115, %v1114
  %v1214 = vpack.c.b16 %v1117, %v1116
  %v1215 = vpack.c.b16 %v1119, %v1118
  %v1216 = vpack.c.b16 %v1121, %v1120
  %v1217 = vpack.c.b16 %v1123, %v1122
  %v1218 = vpack.c.b16 %v1125, %v1124
  %v1219 = vpack.c.b16 %v1127, %v1126
  %v1220 = vpack.c.b16 %v1129, %v1128
  %v1221 = vpack.c.b16 %v1131, %v1130
  %v1222 = vpack.c.b16 %v1133, %v1132
  %v1223 = vpack.c.b16 %v1135, %v1134
  %v1224 = vpack.c.b16 %v1137, %v1136
  %v1225 = vpack.c.b16 %v1139, %v1138
  %v1226 = vpack.c.b16 %v1141, %v1140
  %v1227 = vpack.c.b16 %v1143, %v1142
  %v1228 = vpack.c.b16 %v1145, %v1144
  %v1229 = vpack.c.b16 %v1147, %v1146
  %v1230 = vpack.c.b16 %v1149, %v1148
  %v1231 = vpack.c.b16 %v1151, %v1150
  %v1232 = vpack.c.b16 %v1153, %v1152
  %v1233 = vpack.c.b16 %v1155, %v1154
  %v1234 = vpack.c.b16 %v1157, %v1156
  %v1235 = vpack.c.b16 %v1159, %v1158
  %v1236 = vpack.c.b16 %v1161, %v1160
  %v1237 = vpack.c.b16 %v1163, %v1162
  %v1238 = vpack.c.b16 %v1165, %v1164
  %v1239 = vpack.c.b16 %v1167, %v1166
  %v1240 = vpack.c.b16 %v1169, %v1168
  %v1241 = vpack.c.b16 %v1171, %v1170
  %v1242 = vpack.c.b16 %v1173, %v1172
  %v1243 = vpack.c.b16 %v1175, %v1174
  %v1244 = vpack.c.b16 %v1177, %v1176
  %v1245 = vpack.c.b16 %v1179, %v1178
  %v1246 = vpack.c.b16 %v1181, %v1180
  %v1247 = vpack.c.b16 %v1183, %v1182
  %1312 = vmatprep.subr.bf16.mxu0 0
  %1313 = vmatpush1.bf16.msra.mxu0 %v1184
  %1314 = vmatprep.subr.bf16.mxu0 0
  %1315 = vmatpush1.bf16.msra.mxu0 %v1185
  %1316 = vmatprep.subr.bf16.mxu0 0
  %1317 = vmatpush1.bf16.msra.mxu0 %v1186
  %1318 = vmatprep.subr.bf16.mxu0 0
  %1319 = vmatpush1.bf16.msra.mxu0 %v1187
  %1320 = vmatprep.subr.bf16.mxu0 0
  %1321 = vmatpush1.bf16.msra.mxu0 %v1188
  %1322 = vmatprep.subr.bf16.mxu0 0
  %1323 = vmatpush1.bf16.msra.mxu0 %v1189
  %1324 = vmatprep.subr.bf16.mxu0 0
  %1325 = vmatpush1.bf16.msra.mxu0 %v1190
  %1326 = vmatprep.subr.bf16.mxu0 0
  %1327 = vmatpush1.bf16.msra.mxu0 %v1191
  %1328 = vmatprep.subr.bf16.mxu0 0
  %1329 = vmatpush1.bf16.msra.mxu0 %v1192
  %1330 = vmatprep.subr.bf16.mxu0 0
  %1331 = vmatpush1.bf16.msra.mxu0 %v1193
  %1332 = vmatprep.subr.bf16.mxu0 0
  %1333 = vmatpush1.bf16.msra.mxu0 %v1194
  %1334 = vmatprep.subr.bf16.mxu0 0
  %1335 = vmatpush1.bf16.msra.mxu0 %v1195
  %1336 = vmatprep.subr.bf16.mxu0 0
  %1337 = vmatpush1.bf16.msra.mxu0 %v1196
  %1338 = vmatprep.subr.bf16.mxu0 0
  %1339 = vmatpush1.bf16.msra.mxu0 %v1197
  %1340 = vmatprep.subr.bf16.mxu0 0
  %1341 = vmatpush1.bf16.msra.mxu0 %v1198
  %1342 = vmatprep.subr.bf16.mxu0 0
  %1343 = vmatpush1.bf16.msra.mxu0 %v1199
  %1344 = vmatprep.mubr.bf16.mxu0 %v793
  %1345 = vmatmul.mubr.bf16.gmra.mrb[0].mxu0 %v792
  %v1346 = vpop.f32.mrb[0].mxu0
  %v1347 = vadd.f32 0.0, %v1346
  %v1348 = vpop.f32.mrb[0].mxu0
  %v1349 = vpop.f32.mrb[0].mxu0
  %v1350 = vpop.f32.mrb[0].mxu0
  %1351 = vdwg.mxu0
  %1352 = vmatprep.subr.bf16.mxu0 0
  %1353 = vmatpush1.bf16.msra.mxu0 %v1200
  %1354 = vmatprep.subr.bf16.mxu0 0
  %1355 = vmatpush1.bf16.msra.mxu0 %v1201
  %1356 = vmatprep.subr.bf16.mxu0 0
  %1357 = vmatpush1.bf16.msra.mxu0 %v1202
  %1358 = vmatprep.subr.bf16.mxu0 0
  %1359 = vmatpush1.bf16.msra.mxu0 %v1203
  %1360 = vmatprep.subr.bf16.mxu0 0
  %1361 = vmatpush1.bf16.msra.mxu0 %v1204
  %1362 = vmatprep.subr.bf16.mxu0 0
  %1363 = vmatpush1.bf16.msra.mxu0 %v1205
  %1364 = vmatprep.subr.bf16.mxu0 0
  %1365 = vmatpush1.bf16.msra.mxu0 %v1206
  %1366 = vmatprep.subr.bf16.mxu0 0
  %1367 = vmatpush1.bf16.msra.mxu0 %v1207
  %1368 = vmatprep.subr.bf16.mxu0 0
  %1369 = vmatpush1.bf16.msra.mxu0 %v1208
  %1370 = vmatprep.subr.bf16.mxu0 0
  %1371 = vmatpush1.bf16.msra.mxu0 %v1209
  %1372 = vmatprep.subr.bf16.mxu0 0
  %1373 = vmatpush1.bf16.msra.mxu0 %v1210
  %1374 = vmatprep.subr.bf16.mxu0 0
  %1375 = vmatpush1.bf16.msra.mxu0 %v1211
  %1376 = vmatprep.subr.bf16.mxu0 0
  %1377 = vmatpush1.bf16.msra.mxu0 %v1212
  %1378 = vmatprep.subr.bf16.mxu0 0
  %1379 = vmatpush1.bf16.msra.mxu0 %v1213
  %1380 = vmatprep.subr.bf16.mxu0 0
  %1381 = vmatpush1.bf16.msra.mxu0 %v1214
  %1382 = vmatprep.subr.bf16.mxu0 0
  %1383 = vmatpush1.bf16.msra.mxu0 %v1215
  %1384 = vmatprep.mubr.bf16.mxu0 %v795
  %1385 = vmatmul.mubr.bf16.gmra.mrb[0].mxu0 %v794
  %v1386 = vpop.f32.mrb[0].mxu0
  %v1387 = vadd.f32 %v1347, %v1386
  %v1388 = vpop.f32.mrb[0].mxu0
  %v1389 = vpop.f32.mrb[0].mxu0
  %v1390 = vpop.f32.mrb[0].mxu0
  %1391 = vdwg.mxu0
  %1392 = vmatprep.subr.bf16.mxu0 0
  %1393 = vmatpush1.bf16.msra.mxu0 %v1216
  %1394 = vmatprep.subr.bf16.mxu0 0
  %1395 = vmatpush1.bf16.msra.mxu0 %v1217
  %1396 = vmatprep.subr.bf16.mxu0 0
  %1397 = vmatpush1.bf16.msra.mxu0 %v1218
  %1398 = vmatprep.subr.bf16.mxu0 0
  %1399 = vmatpush1.bf16.msra.mxu0 %v1219
  %1400 = vmatprep.subr.bf16.mxu0 0
  %1401 = vmatpush1.bf16.msra.mxu0 %v1220
  %1402 = vmatprep.subr.bf16.mxu0 0
  %1403 = vmatpush1.bf16.msra.mxu0 %v1221
  %1404 = vmatprep.subr.bf16.mxu0 0
  %1405 = vmatpush1.bf16.msra.mxu0 %v1222
  %1406 = vmatprep.subr.bf16.mxu0 0
  %1407 = vmatpush1.bf16.msra.mxu0 %v1223
  %1408 = vmatprep.subr.bf16.mxu0 0
  %1409 = vmatpush1.bf16.msra.mxu0 %v1224
  %1410 = vmatprep.subr.bf16.mxu0 0
  %1411 = vmatpush1.bf16.msra.mxu0 %v1225
  %1412 = vmatprep.subr.bf16.mxu0 0
  %1413 = vmatpush1.bf16.msra.mxu0 %v1226
  %1414 = vmatprep.subr.bf16.mxu0 0
  %1415 = vmatpush1.bf16.msra.mxu0 %v1227
  %1416 = vmatprep.subr.bf16.mxu0 0
  %1417 = vmatpush1.bf16.msra.mxu0 %v1228
  %1418 = vmatprep.subr.bf16.mxu0 0
  %1419 = vmatpush1.bf16.msra.mxu0 %v1229
  %1420 = vmatprep.subr.bf16.mxu0 0
  %1421 = vmatpush1.bf16.msra.mxu0 %v1230
  %1422 = vmatprep.subr.bf16.mxu0 0
  %1423 = vmatpush1.bf16.msra.mxu0 %v1231
  %1424 = vmatprep.mubr.bf16.mxu0 %v797
  %1425 = vmatmul.mubr.bf16.gmra.mrb[0].mxu0 %v796
  %v1426 = vpop.f32.mrb[0].mxu0
  %v1427 = vadd.f32 %v1387, %v1426
  %v1428 = vpop.f32.mrb[0].mxu0
  %v1429 = vpop.f32.mrb[0].mxu0
  %v1430 = vpop.f32.mrb[0].mxu0
  %1431 = vdwg.mxu0
  %1432 = vmatprep.subr.bf16.mxu0 0
  %1433 = vmatpush1.bf16.msra.mxu0 %v1232
  %1434 = vmatprep.subr.bf16.mxu0 0
  %1435 = vmatpush1.bf16.msra.mxu0 %v1233
  %1436 = vmatprep.subr.bf16.mxu0 0
  %1437 = vmatpush1.bf16.msra.mxu0 %v1234
  %1438 = vmatprep.subr.bf16.mxu0 0
  %1439 = vmatpush1.bf16.msra.mxu0 %v1235
  %1440 = vmatprep.subr.bf16.mxu0 0
  %1441 = vmatpush1.bf16.msra.mxu0 %v1236
  %1442 = vmatprep.subr.bf16.mxu0 0
  %1443 = vmatpush1.bf16.msra.mxu0 %v1237
  %1444 = vmatprep.subr.bf16.mxu0 0
  %1445 = vmatpush1.bf16.msra.mxu0 %v1238
  %1446 = vmatprep.subr.bf16.mxu0 0
  %1447 = vmatpush1.bf16.msra.mxu0 %v1239
  %1448 = vmatprep.subr.bf16.mxu0 0
  %1449 = vmatpush1.bf16.msra.mxu0 %v1240
  %1450 = vmatprep.subr.bf16.mxu0 0
  %1451 = vmatpush1.bf16.msra.mxu0 %v1241
  %1452 = vmatprep.subr.bf16.mxu0 0
  %1453 = vmatpush1.bf16.msra.mxu0 %v1242
  %1454 = vmatprep.subr.bf16.mxu0 0
  %1455 = vmatpush1.bf16.msra.mxu0 %v1243
  %1456 = vmatprep.subr.bf16.mxu0 0
  %1457 = vmatpush1.bf16.msra.mxu0 %v1244
  %1458 = vmatprep.subr.bf16.mxu0 0
  %1459 = vmatpush1.bf16.msra.mxu0 %v1245
  %1460 = vmatprep.subr.bf16.mxu0 0
  %1461 = vmatpush1.bf16.msra.mxu0 %v1246
  %1462 = vmatprep.subr.bf16.mxu0 0
  %1463 = vmatpush1.bf16.msra.mxu0 %v1247
  %1464 = vmatprep.mubr.bf16.mxu0 %v799
  %1465 = vmatmul.mubr.bf16.gmra.mrb[0].mxu0 %v798
  %v1466 = vpop.f32.mrb[0].mxu0
  %v1467 = vadd.f32 %v1427, %v1466
  %v1468 = vpop.f32.mrb[0].mxu0
  %v1469 = vpop.f32.mrb[0].mxu0
  %v1470 = vpop.f32.mrb[0].mxu0
  %1471 = vdwg.mxu0
  %vm1472 = vcmask 261120
  %v1473 = vsel %vm1472, %v1467, 0.0
  %v1474 = vrot.slane %v1473, 4
  %v1475 = vadd.f32 %v1473, %v1474
  %v1476 = vrot.slane %v1475, 2
  %v1477 = vadd.f32 %v1475, %v1476
  %v1478 = vrot.slane %v1477, 1
  %v1479 = vadd.f32 %v1477, %v1478
  %v1480 = vmul.f32 %v1479, 0.125
  %v1481 = vmul.f32 %v1467, %v1467
  %v1482 = vsel %vm1472, %v1481, 0.0
  %v1483 = vrot.slane %v1482, 4
  %v1484 = vadd.f32 %v1482, %v1483
  %v1485 = vrot.slane %v1484, 2
  %v1486 = vadd.f32 %v1484, %v1485
  %v1487 = vrot.slane %v1486, 1
  %v1488 = vadd.f32 %v1486, %v1487
  %v1489 = vmul.f32 %v1488, 0.125
  %v1490 = vld [vmem:[%s3 + $0x10] sm:$0x1]
  %v1491 = vmul.f32 %v1480, %v1480
  %v1492 = vsub.f32 %v1489, %v1491
  %v1493 = vadd.f32 %v1492, 1e-05
  %v1494 = vrsqrt.pop %v1493
  %v1495 = vmul.f32 %v1490, %v1494
  %v1497 = vlaneseq
  %v1498 = vshrl.u32 %v1497, 7
  %v1499 = vsub.s32 0, %v1498
  %v1500 = vrot.slane %v1495, %v1499
  %v1502 = vmul.f32 %v1467, %v1500
  %v1503 = vld [vmem:[%s3 + $0x11] sm:$0x1]
  %v1504 = vmul.f32 %v1480, %v1495
  %v1505 = vsub.f32 %v1503, %v1504
  %v1507 = vlaneseq
  %v1508 = vshrl.u32 %v1507, 7
  %v1509 = vsub.s32 0, %v1508
  %v1510 = vrot.slane %v1505, %v1509
  %v1512 = vadd.f32 %v1502, %v1510
  %v1513 = vmax.f32 %v1512, 0.0
  %v1514 = vpack.c.bf16 %v1513, %v1513
  %v1515 = vld [vmem:[%s6] sm:$0xf]
  %v1516 = vld [vmem:[%s6 + $0x4] sm:$0xf]
  %v1517 = vld [vmem:[%s6 + $0x8] sm:$0xf]
  %v1518 = vld [vmem:[%s6 + $0xc] sm:$0xf]
  %v1519 = vpack.c.bf16 %v43, %v43
  %v1520 = vld [vmem:[%s7] sm:$0xf]
  %v1521 = vld [vmem:[%s7 + $0x4] sm:$0xf]
  %v1522 = vld [vmem:[%s7 + $0x8] sm:$0xf]
  %v1523 = vld [vmem:[%s7 + $0xc] sm:$0xf]
  %v1528 = vunpack.c.l.b16 %v1520
  %v1529 = vunpack.c.l.b16 %v1521
  %v1530 = vunpack.c.l.b16 %v1522
  %v1531 = vunpack.c.l.b16 %v1523
  %v1532 = vpack.c.b16 %v1529, %v1528
  %v1533 = vpack.c.b16 %v1531, %v1530
  %v1537 = vsel %vm1472, %v1519, 0
  %1539 = vmatprep.subr.bf16.mxu0 0
  %1540 = vmatpush1.bf16.msra.mxu0 %v1532
  %1541 = vmatprep.subr.bf16.mxu0 0
  %1542 = vmatpush1.bf16.msra.mxu0 %v1533
  %1543 = vmatprep.subr.bf16.mxu0 0
  %1544 = vmatpush1.bf16.msra.mxu0 0
  %1545 = vmatprep.subr.bf16.mxu0 0
  %1546 = vmatpush1.bf16.msra.mxu0 0
  %1547 = vmatprep.subr.bf16.mxu0 0
  %1548 = vmatpush1.bf16.msra.mxu0 0
  %1549 = vmatprep.subr.bf16.mxu0 0
  %1550 = vmatpush1.bf16.msra.mxu0 0
  %1551 = vmatprep.subr.bf16.mxu0 0
  %1552 = vmatpush1.bf16.msra.mxu0 0
  %1553 = vmatprep.subr.bf16.mxu0 0
  %1554 = vmatpush1.bf16.msra.mxu0 0
  %1555 = vmatprep.subr.bf16.mxu0 0
  %1556 = vmatpush1.bf16.msra.mxu0 0
  %1557 = vmatprep.subr.bf16.mxu0 0
  %1558 = vmatpush1.bf16.msra.mxu0 0
  %1559 = vmatprep.subr.bf16.mxu0 0
  %1560 = vmatpush1.bf16.msra.mxu0 0
  %1561 = vmatprep.subr.bf16.mxu0 0
  %1562 = vmatpush1.bf16.msra.mxu0 0
  %1563 = vmatprep.subr.bf16.mxu0 0
  %1564 = vmatpush1.bf16.msra.mxu0 0
  %1565 = vmatprep.subr.bf16.mxu0 0
  %1566 = vmatpush1.bf16.msra.mxu0 0
  %1567 = vmatprep.subr.bf16.mxu0 0
  %1568 = vmatpush1.bf16.msra.mxu0 0
  %1569 = vmatprep.subr.bf16.mxu0 0
  %1570 = vmatpush1.bf16.msra.mxu0 0
  %1571 = vmatprep.mubr.bf16.mxu0 0
  %1572 = vmatmul.mubr.bf16.gmra.mrb[0].mxu0 %v1537
  %v1573 = vpop.f32.mrb[0].mxu0
  %v1574 = vadd.f32 0.0, %v1573
  %v1575 = vpop.f32.mrb[0].mxu0
  %v1576 = vpop.f32.mrb[0].mxu0
  %v1577 = vpop.f32.mrb[0].mxu0
  %1578 = vdwg.mxu0
  %v1583 = vunpack.c.l.b16 %v1515
  %v1584 = vunpack.c.l.b16 %v1516
  %v1585 = vunpack.c.l.b16 %v1517
  %v1586 = vunpack.c.l.b16 %v1518
  %v1587 = vpack.c.b16 %v1584, %v1583
  %v1588 = vpack.c.b16 %v1586, %v1585
  %v1592 = vsel %vm1472, %v1514, 0
  %1594 = vmatprep.subr.bf16.mxu0 0
  %1595 = vmatpush1.bf16.msra.mxu0 %v1587
  %1596 = vmatprep.subr.bf16.mxu0 0
  %1597 = vmatpush1.bf16.msra.mxu0 %v1588
  %1598 = vmatprep.subr.bf16.mxu0 0
  %1599 = vmatpush1.bf16.msra.mxu0 0
  %1600 = vmatprep.subr.bf16.mxu0 0
  %1601 = vmatpush1.bf16.msra.mxu0 0
  %1602 = vmatprep.subr.bf16.mxu0 0
  %1603 = vmatpush1.bf16.msra.mxu0 0
  %1604 = vmatprep.subr.bf16.mxu0 0
  %1605 = vmatpush1.bf16.msra.mxu0 0
  %1606 = vmatprep.subr.bf16.mxu0 0
  %1607 = vmatpush1.bf16.msra.mxu0 0
  %1608 = vmatprep.subr.bf16.mxu0 0
  %1609 = vmatpush1.bf16.msra.mxu0 0
  %1610 = vmatprep.subr.bf16.mxu0 0
  %1611 = vmatpush1.bf16.msra.mxu0 0
  %1612 = vmatprep.subr.bf16.mxu0 0
  %1613 = vmatpush1.bf16.msra.mxu0 0
  %1614 = vmatprep.subr.bf16.mxu0 0
  %1615 = vmatpush1.bf16.msra.mxu0 0
  %1616 = vmatprep.subr.bf16.mxu0 0
  %1617 = vmatpush1.bf16.msra.mxu0 0
  %1618 = vmatprep.subr.bf16.mxu0 0
  %1619 = vmatpush1.bf16.msra.mxu0 0
  %1620 = vmatprep.subr.bf16.mxu0 0
  %1621 = vmatpush1.bf16.msra.mxu0 0
  %1622 = vmatprep.subr.bf16.mxu0 0
  %1623 = vmatpush1.bf16.msra.mxu0 0
  %1624 = vmatprep.subr.bf16.mxu0 0
  %1625 = vmatpush1.bf16.msra.mxu0 0
  %1626 = vmatprep.mubr.bf16.mxu0 0
  %1627 = vmatmul.mubr.bf16.gmra.mrb[0].mxu0 %v1592
  %v1628 = vpop.f32.mrb[0].mxu0
  %v1629 = vadd.f32 %v1574, %v1628
  %v1630 = vpop.f32.mrb[0].mxu0
  %v1631 = vpop.f32.mrb[0].mxu0
  %v1632 = vpop.f32.mrb[0].mxu0
  %1633 = vdwg.mxu0
  %v1634 = vld [vmem:[%s3 + $0x12] sm:$0x1]
  %v1636 = vlaneseq
  %v1637 = vshrl.u32 %v1636, 7
  %v1638 = vsub.s32 0, %v1637
  %v1639 = vrot.slane %v1634, %v1638
  %v1641 = vadd.f32 %v1629, %v1639
  %v1642 = vlaneseq
  %v1643 = vand.u32 %v1642, 127
  %vm1644 = vcmp.ge.s32.totalorder %v1643, 64
  %vm1645 = vcmp.lt.s32.totalorder %v1643, 96
  %vm1646 = vmand %vm1644, %vm1645
  %v1647 = vmul.f32 %v1641, 0.5
  %v1648 = vsel %vm1646, %v1641, %v1647
  %v1649 = vtanh.pop %v1648
  %v1650 = vmul.f32 %v1649, 0.5
  %v1651 = vadd.f32 %v1650, 0.5
  %v1652 = vsel %vm1646, %v1649, %v1651
  %1654 = vrot.lane.b32.xlu0 %v44, 32
  %v1655 = vpop.permute.xlu0 %1654
  %v1657 = vmul.f32 %v1652, %v1655
  %1659 = vrot.lane.b32.xlu0 %v1652, 64
  %v1660 = vpop.permute.xlu0 %1659
  %v1662 = vmul.f32 %v1652, %v1660
  %1664 = vrot.lane.b32.xlu0 %v1662, 32
  %v1665 = vpop.permute.xlu0 %1664
  %v1667 = vadd.f32 %v1657, %v1665
  %v1668 = vtanh.pop %v1667
  %1670 = vrot.lane.b32.xlu0 %v1668, 64
  %v1671 = vpop.permute.xlu0 %1670
  %v1673 = vmul.f32 %v1652, %v1671
  %v1674 = vpack.c.bf16 %v1673, %v1673
  %v1675 = vld [vmem:[%s8] sm:$0xff]
  %v1676 = vld [vmem:[%s8 + $0x8] sm:$0xff]
  %v1677 = vld [vmem:[%s8 + $0x10] sm:$0xff]
  %v1678 = vld [vmem:[%s8 + $0x18] sm:$0xff]
  %v1679 = vpack.c.bf16 %v1667, %v1667
  %v1680 = vld [vmem:[%s9] sm:$0xff]
  %v1681 = vld [vmem:[%s9 + $0x8] sm:$0xff]
  %v1682 = vld [vmem:[%s9 + $0x10] sm:$0xff]
  %v1683 = vld [vmem:[%s9 + $0x18] sm:$0xff]
  %1685 = vrot.lane.b32.xlu0 %v1679, 96
  %v1686 = vpop.permute.xlu0 %1685
  %v1691 = vunpack.c.l.b16 %v1680
  %v1692 = vunpack.c.h.b16 %v1680
  %v1693 = vunpack.c.l.b16 %v1681
  %v1694 = vunpack.c.h.b16 %v1681
  %v1695 = vunpack.c.l.b16 %v1682
  %v1696 = vunpack.c.h.b16 %v1682
  %v1697 = vunpack.c.l.b16 %v1683
  %v1698 = vunpack.c.h.b16 %v1683
  %v1699 = vpack.c.b16 %v1693, %v1691
  %v1700 = vpack.c.b16 %v1694, %v1692
  %v1701 = vpack.c.b16 %v1697, %v1695
  %v1702 = vpack.c.b16 %v1698, %v1696
  %v1708 = vsel %vm1472, %v1686, 0
  %1710 = vmatprep.subr.bf16.mxu0 %v1700
  %1711 = vmatpush1.bf16.msra.mxu0 %v1699
  %1712 = vmatprep.subr.bf16.mxu0 %v1702
  %1713 = vmatpush1.bf16.msra.mxu0 %v1701
  %1714 = vmatprep.subr.bf16.mxu0 0
  %1715 = vmatpush1.bf16.msra.mxu0 0
  %1716 = vmatprep.subr.bf16.mxu0 0
  %1717 = vmatpush1.bf16.msra.mxu0 0
  %1718 = vmatprep.subr.bf16.mxu0 0
  %1719 = vmatpush1.bf16.msra.mxu0 0
  %1720 = vmatprep.subr.bf16.mxu0 0
  %1721 = vmatpush1.bf16.msra.mxu0 0
  %1722 = vmatprep.subr.bf16.mxu0 0
  %1723 = vmatpush1.bf16.msra.mxu0 0
  %1724 = vmatprep.subr.bf16.mxu0 0
  %1725 = vmatpush1.bf16.msra.mxu0 0
  %1726 = vmatprep.subr.bf16.mxu0 0
  %1727 = vmatpush1.bf16.msra.mxu0 0
  %1728 = vmatprep.subr.bf16.mxu0 0
  %1729 = vmatpush1.bf16.msra.mxu0 0
  %1730 = vmatprep.subr.bf16.mxu0 0
  %1731 = vmatpush1.bf16.msra.mxu0 0
  %1732 = vmatprep.subr.bf16.mxu0 0
  %1733 = vmatpush1.bf16.msra.mxu0 0
  %1734 = vmatprep.subr.bf16.mxu0 0
  %1735 = vmatpush1.bf16.msra.mxu0 0
  %1736 = vmatprep.subr.bf16.mxu0 0
  %1737 = vmatpush1.bf16.msra.mxu0 0
  %1738 = vmatprep.subr.bf16.mxu0 0
  %1739 = vmatpush1.bf16.msra.mxu0 0
  %1740 = vmatprep.subr.bf16.mxu0 0
  %1741 = vmatpush1.bf16.msra.mxu0 0
  %1742 = vmatprep.mubr.bf16.mxu0 0
  %1743 = vmatmul.mubr.bf16.gmra.mrb[0].mxu0 %v1708
  %v1744 = vpop.f32.mrb[0].mxu0
  %v1745 = vadd.f32 0.0, %v1744
  %v1746 = vpop.f32.mrb[0].mxu0
  %v1747 = vadd.f32 0.0, %v1746
  %v1748 = vpop.f32.mrb[0].mxu0
  %v1749 = vpop.f32.mrb[0].mxu0
  %1750 = vdwg.mxu0
  %1752 = vrot.lane.b32.xlu0 %v1674, 32
  %v1753 = vpop.permute.xlu0 %1752
  %v1758 = vunpack.c.l.b16 %v1675
  %v1759 = vunpack.c.h.b16 %v1675
  %v1760 = vunpack.c.l.b16 %v1676
  %v1761 = vunpack.c.h.b16 %v1676
  %v1762 = vunpack.c.l.b16 %v1677
  %v1763 = vunpack.c.h.b16 %v1677
  %v1764 = vunpack.c.l.b16 %v1678
  %v1765 = vunpack.c.h.b16 %v1678
  %v1766 = vpack.c.b16 %v1760, %v1758
  %v1767 = vpack.c.b16 %v1761, %v1759
  %v1768 = vpack.c.b16 %v1764, %v1762
  %v1769 = vpack.c.b16 %v1765, %v1763
  %v1775 = vsel %vm1472, %v1753, 0
  %1777 = vmatprep.subr.bf16.mxu0 %v1767
  %1778 = vmatpush1.bf16.msra.mxu0 %v1766
  %1779 = vmatprep.subr.bf16.mxu0 %v1769
  %1780 = vmatpush1.bf16.msra.mxu0 %v1768
  %1781 = vmatprep.subr.bf16.mxu0 0
  %1782 = vmatpush1.bf16.msra.mxu0 0
  %1783 = vmatprep.subr.bf16.mxu0 0
  %1784 = vmatpush1.bf16.msra.mxu0 0
  %1785 = vmatprep.subr.bf16.mxu0 0
  %1786 = vmatpush1.bf16.msra.mxu0 0
  %1787 = vmatprep.subr.bf16.mxu0 0
  %1788 = vmatpush1.bf16.msra.mxu0 0
  %1789 = vmatprep.subr.bf16.mxu0 0
  %1790 = vmatpush1.bf16.msra.mxu0 0
  %1791 = vmatprep.subr.bf16.mxu0 0
  %1792 = vmatpush1.bf16.msra.mxu0 0
  %1793 = vmatprep.subr.bf16.mxu0 0
  %1794 = vmatpush1.bf16.msra.mxu0 0
  %1795 = vmatprep.subr.bf16.mxu0 0
  %1796 = vmatpush1.bf16.msra.mxu0 0
  %1797 = vmatprep.subr.bf16.mxu0 0
  %1798 = vmatpush1.bf16.msra.mxu0 0
  %1799 = vmatprep.subr.bf16.mxu0 0
  %1800 = vmatpush1.bf16.msra.mxu0 0
  %1801 = vmatprep.subr.bf16.mxu0 0
  %1802 = vmatpush1.bf16.msra.mxu0 0
  %1803 = vmatprep.subr.bf16.mxu0 0
  %1804 = vmatpush1.bf16.msra.mxu0 0
  %1805 = vmatprep.subr.bf16.mxu0 0
  %1806 = vmatpush1.bf16.msra.mxu0 0
  %1807 = vmatprep.subr.bf16.mxu0 0
  %1808 = vmatpush1.bf16.msra.mxu0 0
  %1809 = vmatprep.mubr.bf16.mxu0 0
  %1810 = vmatmul.mubr.bf16.gmra.mrb[0].mxu0 %v1775
  %v1811 = vpop.f32.mrb[0].mxu0
  %v1812 = vadd.f32 %v1745, %v1811
  %v1813 = vpop.f32.mrb[0].mxu0
  %v1814 = vadd.f32 %v1747, %v1813
  %v1815 = vpop.f32.mrb[0].mxu0
  %v1816 = vpop.f32.mrb[0].mxu0
  %1817 = vdwg.mxu0
  %v1818 = vrot.slane %v1812, 4
  %v1819 = vadd.f32 %v1812, %v1818
  %v1820 = vrot.slane %v1819, 2
  %v1821 = vadd.f32 %v1819, %v1820
  %v1822 = vrot.slane %v1821, 1
  %v1823 = vadd.f32 %v1821, %v1822
  %v1824 = vrot.slane %v1814, 4
  %v1825 = vadd.f32 %v1814, %v1824
  %v1826 = vrot.slane %v1825, 2
  %v1827 = vadd.f32 %v1825, %v1826
  %v1828 = vrot.slane %v1827, 1
  %v1829 = vadd.f32 %v1827, %v1828
  %v1830 = vmul.f32 %v1823, 0.125
  %v1831 = vmul.f32 %v1829, 0.125
  %v1832 = vmul.f32 %v1812, %v1812
  %v1833 = vmul.f32 %v1814, %v1814
  %v1834 = vrot.slane %v1832, 4
  %v1835 = vadd.f32 %v1832, %v1834
  %v1836 = vrot.slane %v1835, 2
  %v1837 = vadd.f32 %v1835, %v1836
  %v1838 = vrot.slane %v1837, 1
  %v1839 = vadd.f32 %v1837, %v1838
  %v1840 = vrot.slane %v1833, 4
  %v1841 = vadd.f32 %v1833, %v1840
  %v1842 = vrot.slane %v1841, 2
  %v1843 = vadd.f32 %v1841, %v1842
  %v1844 = vrot.slane %v1843, 1
  %v1845 = vadd.f32 %v1843, %v1844
  %v1846 = vmul.f32 %v1839, 0.125
  %v1847 = vmul.f32 %v1845, 0.125
  %v1848 = vld [vmem:[%s3 + $0x13] sm:$0x3]
  %v1849 = vmul.f32 %v1830, %v1830
  %v1850 = vmul.f32 %v1831, %v1831
  %v1851 = vsub.f32 %v1846, %v1849
  %v1852 = vsub.f32 %v1847, %v1850
  %v1853 = vadd.f32 %v1851, 1e-05
  %v1854 = vadd.f32 %v1852, 1e-05
  %v1855 = vrsqrt.pop %v1853
  %v1856 = vrsqrt.pop %v1854
  %v1859 = vcombine.low %v1855, %v1856
  %v1861 = vunpack.c.l.s4 1966171168
  %v1862 = vunpack.c.0.s8 %v1861
  %v1863 = vlaneseq
  %v1864 = vshrl.u32 %v1863, 7
  %v1865 = vsub.s32 %v1862, %v1864
  %v1866 = vrot.slane %v1859, %v1865
  %v1868 = vunpack.c.l.s4 1966171168
  %v1869 = vunpack.c.0.s8 %v1868
  %v1870 = vlaneseq
  %v1871 = vshrl.u32 %v1870, 7
  %v1872 = vsub.s32 %v1869, %v1871
  %v1873 = vrot.slane %v1866, %v1872
  %v1875 = vmul.f32 %v1848, %v1873
  %v1877 = vlaneseq
  %v1878 = vshrl.u32 %v1877, 7
  %v1879 = vsub.s32 0, %v1878
  %v1880 = vrot.slane %v1875, %v1879
  %v1881 = vlaneseq
  %v1882 = vshrl.u32 %v1881, 7
  %v1883 = vsub.s32 1, %v1882
  %v1884 = vrot.slane %v1875, %v1883
  %v1887 = vmul.f32 %v1812, %v1880
  %v1888 = vmul.f32 %v1814, %v1884
  %v1889 = vld [vmem:[%s3 + $0x15] sm:$0x3]
  %v1890 = vmul.f32 %v1830, %v1880
  %v1891 = vmul.f32 %v1831, %v1884
  %v1894 = vcombine.low %v1890, %v1891
  %v1896 = vunpack.c.l.s4 1966171168
  %v1897 = vunpack.c.0.s8 %v1896
  %v1898 = vlaneseq
  %v1899 = vshrl.u32 %v1898, 7
  %v1900 = vsub.s32 %v1897, %v1899
  %v1901 = vrot.slane %v1894, %v1900
  %v1903 = vunpack.c.l.s4 1966171168
  %v1904 = vunpack.c.0.s8 %v1903
  %v1905 = vlaneseq
  %v1906 = vshrl.u32 %v1905, 7
  %v1907 = vsub.s32 %v1904, %v1906
  %v1908 = vrot.slane %v1901, %v1907
  %v1910 = vsub.f32 %v1889, %v1908
  %v1912 = vlaneseq
  %v1913 = vshrl.u32 %v1912, 7
  %v1914 = vsub.s32 0, %v1913
  %v1915 = vrot.slane %v1910, %v1914
  %v1916 = vlaneseq
  %v1917 = vshrl.u32 %v1916, 7
  %v1918 = vsub.s32 1, %v1917
  %v1919 = vrot.slane %v1910, %v1918
  %v1922 = vadd.f32 %v1887, %v1915
  %v1923 = vadd.f32 %v1888, %v1919
  %v1924 = vmax.f32 %v1922, 0.0
  %v1925 = vmax.f32 %v1923, 0.0
  %v1926 = vpack.c.bf16 %v1924, %v1924
  %v1927 = vpack.c.bf16 %v1925, %v1925
  %v1928 = vld [vmem:[%s10] sm:$0xf]
  %v1929 = vld [vmem:[%s10 + $0x4] sm:$0xf]
  %v1930 = vld [vmem:[%s10 + $0x8] sm:$0xf]
  %v1931 = vld [vmem:[%s10 + $0xc] sm:$0xf]
  %v1932 = vld [vmem:[%s10 + $0x10] sm:$0xf]
  %v1933 = vld [vmem:[%s10 + $0x14] sm:$0xf]
  %v1934 = vld [vmem:[%s10 + $0x18] sm:$0xf]
  %v1935 = vld [vmem:[%s10 + $0x1c] sm:$0xf]
  %v1936 = vld [vmem:[%s10 + $0x20] sm:$0xf]
  %v1937 = vld [vmem:[%s10 + $0x24] sm:$0xf]
  %v1938 = vld [vmem:[%s10 + $0x28] sm:$0xf]
  %v1939 = vld [vmem:[%s10 + $0x2c] sm:$0xf]
  %v1940 = vld [vmem:[%s10 + $0x30] sm:$0xf]
  %v1941 = vld [vmem:[%s10 + $0x34] sm:$0xf]
  %v1942 = vld [vmem:[%s10 + $0x38] sm:$0xf]
  %v1943 = vld [vmem:[%s10 + $0x3c] sm:$0xf]
  %v1944 = vld [vmem:[%s10 + $0x40] sm:$0xf]
  %v1945 = vld [vmem:[%s10 + $0x44] sm:$0xf]
  %v1946 = vld [vmem:[%s10 + $0x48] sm:$0xf]
  %v1947 = vld [vmem:[%s10 + $0x4c] sm:$0xf]
  %v1948 = vld [vmem:[%s10 + $0x50] sm:$0xf]
  %v1949 = vld [vmem:[%s10 + $0x54] sm:$0xf]
  %v1950 = vld [vmem:[%s10 + $0x58] sm:$0xf]
  %v1951 = vld [vmem:[%s10 + $0x5c] sm:$0xf]
  %v1952 = vld [vmem:[%s10 + $0x60] sm:$0xf]
  %v1953 = vld [vmem:[%s10 + $0x64] sm:$0xf]
  %v1954 = vld [vmem:[%s10 + $0x68] sm:$0xf]
  %v1955 = vld [vmem:[%s10 + $0x6c] sm:$0xf]
  %v1956 = vld [vmem:[%s10 + $0x70] sm:$0xf]
  %v1957 = vld [vmem:[%s10 + $0x74] sm:$0xf]
  %v1958 = vld [vmem:[%s10 + $0x78] sm:$0xf]
  %v1959 = vld [vmem:[%s10 + $0x7c] sm:$0xf]
  %v1992 = vunpack.c.l.b16 %v1928
  %v1993 = vunpack.c.l.b16 %v1929
  %v1994 = vunpack.c.l.b16 %v1930
  %v1995 = vunpack.c.l.b16 %v1931
  %v1996 = vunpack.c.l.b16 %v1932
  %v1997 = vunpack.c.l.b16 %v1933
  %v1998 = vunpack.c.l.b16 %v1934
  %v1999 = vunpack.c.l.b16 %v1935
  %v2000 = vunpack.c.l.b16 %v1936
  %v2001 = vunpack.c.l.b16 %v1937
  %v2002 = vunpack.c.l.b16 %v1938
  %v2003 = vunpack.c.l.b16 %v1939
  %v2004 = vunpack.c.l.b16 %v1940
  %v2005 = vunpack.c.l.b16 %v1941
  %v2006 = vunpack.c.l.b16 %v1942
  %v2007 = vunpack.c.l.b16 %v1943
  %v2008 = vunpack.c.l.b16 %v1944
  %v2009 = vunpack.c.l.b16 %v1945
  %v2010 = vunpack.c.l.b16 %v1946
  %v2011 = vunpack.c.l.b16 %v1947
  %v2012 = vunpack.c.l.b16 %v1948
  %v2013 = vunpack.c.l.b16 %v1949
  %v2014 = vunpack.c.l.b16 %v1950
  %v2015 = vunpack.c.l.b16 %v1951
  %v2016 = vunpack.c.l.b16 %v1952
  %v2017 = vunpack.c.l.b16 %v1953
  %v2018 = vunpack.c.l.b16 %v1954
  %v2019 = vunpack.c.l.b16 %v1955
  %v2020 = vunpack.c.l.b16 %v1956
  %v2021 = vunpack.c.l.b16 %v1957
  %v2022 = vunpack.c.l.b16 %v1958
  %v2023 = vunpack.c.l.b16 %v1959
  %v2024 = vpack.c.b16 %v1993, %v1992
  %v2025 = vpack.c.b16 %v1995, %v1994
  %v2026 = vpack.c.b16 %v1997, %v1996
  %v2027 = vpack.c.b16 %v1999, %v1998
  %v2028 = vpack.c.b16 %v2001, %v2000
  %v2029 = vpack.c.b16 %v2003, %v2002
  %v2030 = vpack.c.b16 %v2005, %v2004
  %v2031 = vpack.c.b16 %v2007, %v2006
  %v2032 = vpack.c.b16 %v2009, %v2008
  %v2033 = vpack.c.b16 %v2011, %v2010
  %v2034 = vpack.c.b16 %v2013, %v2012
  %v2035 = vpack.c.b16 %v2015, %v2014
  %v2036 = vpack.c.b16 %v2017, %v2016
  %v2037 = vpack.c.b16 %v2019, %v2018
  %v2038 = vpack.c.b16 %v2021, %v2020
  %v2039 = vpack.c.b16 %v2023, %v2022
  %2056 = vmatprep.subr.bf16.mxu0 0
  %2057 = vmatpush1.bf16.msra.mxu0 %v2024
  %2058 = vmatprep.subr.bf16.mxu0 0
  %2059 = vmatpush1.bf16.msra.mxu0 %v2025
  %2060 = vmatprep.subr.bf16.mxu0 0
  %2061 = vmatpush1.bf16.msra.mxu0 %v2026
  %2062 = vmatprep.subr.bf16.mxu0 0
  %2063 = vmatpush1.bf16.msra.mxu0 %v2027
  %2064 = vmatprep.subr.bf16.mxu0 0
  %2065 = vmatpush1.bf16.msra.mxu0 %v2028
  %2066 = vmatprep.subr.bf16.mxu0 0
  %2067 = vmatpush1.bf16.msra.mxu0 %v2029
  %2068 = vmatprep.subr.bf16.mxu0 0
  %2069 = vmatpush1.bf16.msra.mxu0 %v2030
  %2070 = vmatprep.subr.bf16.mxu0 0
  %2071 = vmatpush1.bf16.msra.mxu0 %v2031
  %2072 = vmatprep.subr.bf16.mxu0 0
  %2073 = vmatpush1.bf16.msra.mxu0 %v2032
  %2074 = vmatprep.subr.bf16.mxu0 0
  %2075 = vmatpush1.bf16.msra.mxu0 %v2033
  %2076 = vmatprep.subr.bf16.mxu0 0
  %2077 = vmatpush1.bf16.msra.mxu0 %v2034
  %2078 = vmatprep.subr.bf16.mxu0 0
  %2079 = vmatpush1.bf16.msra.mxu0 %v2035
  %2080 = vmatprep.subr.bf16.mxu0 0
  %2081 = vmatpush1.bf16.msra.mxu0 %v2036
  %2082 = vmatprep.subr.bf16.mxu0 0
  %2083 = vmatpush1.bf16.msra.mxu0 %v2037
  %2084 = vmatprep.subr.bf16.mxu0 0
  %2085 = vmatpush1.bf16.msra.mxu0 %v2038
  %2086 = vmatprep.subr.bf16.mxu0 0
  %2087 = vmatpush1.bf16.msra.mxu0 %v2039
  %2088 = vmatprep.mubr.bf16.mxu0 %v1927
  %2089 = vmatmul.mubr.bf16.gmra.mrb[0].mxu0 %v1926
  %v2090 = vpop.f32.mrb[0].mxu0
  %v2091 = vadd.f32 0.0, %v2090
  %v2092 = vpop.f32.mrb[0].mxu0
  %v2093 = vpop.f32.mrb[0].mxu0
  %v2094 = vpop.f32.mrb[0].mxu0
  %2095 = vdwg.mxu0
  %v2096 = vrot.slane %v2091, 4
  %v2097 = vadd.f32 %v2091, %v2096
  %v2098 = vrot.slane %v2097, 2
  %v2099 = vadd.f32 %v2097, %v2098
  %v2100 = vrot.slane %v2099, 1
  %v2101 = vadd.f32 %v2099, %v2100
  %v2102 = vmul.f32 %v2101, 0.125
  %v2103 = vmul.f32 %v2091, %v2091
  %v2104 = vrot.slane %v2103, 4
  %v2105 = vadd.f32 %v2103, %v2104
  %v2106 = vrot.slane %v2105, 2
  %v2107 = vadd.f32 %v2105, %v2106
  %v2108 = vrot.slane %v2107, 1
  %v2109 = vadd.f32 %v2107, %v2108
  %v2110 = vmul.f32 %v2109, 0.125
  %v2111 = vld [vmem:[%s3 + $0x17] sm:$0x1]
  %v2112 = vmul.f32 %v2102, %v2102
  %v2113 = vsub.f32 %v2110, %v2112
  %v2114 = vadd.f32 %v2113, 1e-05
  %v2115 = vrsqrt.pop %v2114
  %v2116 = vmul.f32 %v2111, %v2115
  %v2118 = vlaneseq
  %v2119 = vshrl.u32 %v2118, 7
  %v2120 = vsub.s32 0, %v2119
  %v2121 = vrot.slane %v2116, %v2120
  %v2123 = vmul.f32 %v2091, %v2121
  %v2124 = vld [vmem:[%s3 + $0x18] sm:$0x1]
  %v2125 = vmul.f32 %v2102, %v2116
  %v2126 = vsub.f32 %v2124, %v2125
  %v2128 = vlaneseq
  %v2129 = vshrl.u32 %v2128, 7
  %v2130 = vsub.s32 0, %v2129
  %v2131 = vrot.slane %v2126, %v2130
  %v2133 = vadd.f32 %v2123, %v2131
  %v2134 = vmax.f32 %v2133, 0.0
  %v2135 = vpack.c.bf16 %v2134, %v2134
  %v2136 = vld [vmem:[%s11] sm:$0xf]
  %v2137 = vld [vmem:[%s11 + $0x4] sm:$0xf]
  %v2138 = vld [vmem:[%s11 + $0x8] sm:$0xf]
  %v2139 = vld [vmem:[%s11 + $0xc] sm:$0xf]
  %v2140 = vld [vmem:[%s11 + $0x10] sm:$0xf]
  %v2141 = vld [vmem:[%s11 + $0x14] sm:$0xf]
  %v2142 = vld [vmem:[%s11 + $0x18] sm:$0xf]
  %v2143 = vld [vmem:[%s11 + $0x1c] sm:$0xf]
  %v2144 = vld [vmem:[%s11 + $0x20] sm:$0xf]
  %v2145 = vld [vmem:[%s11 + $0x24] sm:$0xf]
  %v2146 = vld [vmem:[%s11 + $0x28] sm:$0xf]
  %v2147 = vld [vmem:[%s11 + $0x2c] sm:$0xf]
  %v2148 = vld [vmem:[%s11 + $0x30] sm:$0xf]
  %v2149 = vld [vmem:[%s11 + $0x34] sm:$0xf]
  %v2150 = vld [vmem:[%s11 + $0x38] sm:$0xf]
  %v2151 = vld [vmem:[%s11 + $0x3c] sm:$0xf]
  %v2168 = vunpack.c.l.b16 %v2136
  %v2169 = vunpack.c.l.b16 %v2137
  %v2170 = vunpack.c.l.b16 %v2138
  %v2171 = vunpack.c.l.b16 %v2139
  %v2172 = vunpack.c.l.b16 %v2140
  %v2173 = vunpack.c.l.b16 %v2141
  %v2174 = vunpack.c.l.b16 %v2142
  %v2175 = vunpack.c.l.b16 %v2143
  %v2176 = vunpack.c.l.b16 %v2144
  %v2177 = vunpack.c.l.b16 %v2145
  %v2178 = vunpack.c.l.b16 %v2146
  %v2179 = vunpack.c.l.b16 %v2147
  %v2180 = vunpack.c.l.b16 %v2148
  %v2181 = vunpack.c.l.b16 %v2149
  %v2182 = vunpack.c.l.b16 %v2150
  %v2183 = vunpack.c.l.b16 %v2151
  %v2184 = vpack.c.b16 %v2169, %v2168
  %v2185 = vpack.c.b16 %v2171, %v2170
  %v2186 = vpack.c.b16 %v2173, %v2172
  %v2187 = vpack.c.b16 %v2175, %v2174
  %v2188 = vpack.c.b16 %v2177, %v2176
  %v2189 = vpack.c.b16 %v2179, %v2178
  %v2190 = vpack.c.b16 %v2181, %v2180
  %v2191 = vpack.c.b16 %v2183, %v2182
  %2200 = vmatprep.subr.bf16.mxu0 0
  %2201 = vmatpush1.bf16.msra.mxu0 %v2184
  %2202 = vmatprep.subr.bf16.mxu0 0
  %2203 = vmatpush1.bf16.msra.mxu0 %v2185
  %2204 = vmatprep.subr.bf16.mxu0 0
  %2205 = vmatpush1.bf16.msra.mxu0 %v2186
  %2206 = vmatprep.subr.bf16.mxu0 0
  %2207 = vmatpush1.bf16.msra.mxu0 %v2187
  %2208 = vmatprep.subr.bf16.mxu0 0
  %2209 = vmatpush1.bf16.msra.mxu0 %v2188
  %2210 = vmatprep.subr.bf16.mxu0 0
  %2211 = vmatpush1.bf16.msra.mxu0 %v2189
  %2212 = vmatprep.subr.bf16.mxu0 0
  %2213 = vmatpush1.bf16.msra.mxu0 %v2190
  %2214 = vmatprep.subr.bf16.mxu0 0
  %2215 = vmatpush1.bf16.msra.mxu0 %v2191
  %2216 = vmatprep.subr.bf16.mxu0 0
  %2217 = vmatpush1.bf16.msra.mxu0 0
  %2218 = vmatprep.subr.bf16.mxu0 0
  %2219 = vmatpush1.bf16.msra.mxu0 0
  %2220 = vmatprep.subr.bf16.mxu0 0
  %2221 = vmatpush1.bf16.msra.mxu0 0
  %2222 = vmatprep.subr.bf16.mxu0 0
  %2223 = vmatpush1.bf16.msra.mxu0 0
  %2224 = vmatprep.subr.bf16.mxu0 0
  %2225 = vmatpush1.bf16.msra.mxu0 0
  %2226 = vmatprep.subr.bf16.mxu0 0
  %2227 = vmatpush1.bf16.msra.mxu0 0
  %2228 = vmatprep.subr.bf16.mxu0 0
  %2229 = vmatpush1.bf16.msra.mxu0 0
  %2230 = vmatprep.subr.bf16.mxu0 0
  %2231 = vmatpush1.bf16.msra.mxu0 0
  %2232 = vmatprep.mubr.bf16.mxu0 0
  %2233 = vmatmul.mubr.bf16.gmra.mrb[0].mxu0 %v2135
  %v2234 = vpop.f32.mrb[0].mxu0
  %v2235 = vadd.f32 0.0, %v2234
  %v2236 = vpop.f32.mrb[0].mxu0
  %v2237 = vpop.f32.mrb[0].mxu0
  %v2238 = vpop.f32.mrb[0].mxu0
  %2239 = vdwg.mxu0
  %vm2240 = vcmask 31744
  %v2241 = vsel %vm2240, %v2235, 0.0
  %v2242 = vrot.slane %v2241, 4
  %v2243 = vadd.f32 %v2241, %v2242
  %v2244 = vrot.slane %v2243, 2
  %v2245 = vadd.f32 %v2243, %v2244
  %v2246 = vrot.slane %v2245, 1
  %v2247 = vadd.f32 %v2245, %v2246
  %v2248 = vmul.f32 %v2247, 0.125
  %v2249 = vmul.f32 %v2235, %v2235
  %v2250 = vsel %vm2240, %v2249, 0.0
  %v2251 = vrot.slane %v2250, 4
  %v2252 = vadd.f32 %v2250, %v2251
  %v2253 = vrot.slane %v2252, 2
  %v2254 = vadd.f32 %v2252, %v2253
  %v2255 = vrot.slane %v2254, 1
  %v2256 = vadd.f32 %v2254, %v2255
  %v2257 = vmul.f32 %v2256, 0.125
  %v2258 = vld [vmem:[%s3 + $0x19] sm:$0x1]
  %v2259 = vmul.f32 %v2248, %v2248
  %v2260 = vsub.f32 %v2257, %v2259
  %v2261 = vadd.f32 %v2260, 1e-05
  %v2262 = vrsqrt.pop %v2261
  %v2263 = vmul.f32 %v2258, %v2262
  %v2265 = vlaneseq
  %v2266 = vshrl.u32 %v2265, 7
  %v2267 = vsub.s32 0, %v2266
  %v2268 = vrot.slane %v2263, %v2267
  %v2270 = vmul.f32 %v2235, %v2268
  %v2271 = vld [vmem:[%s3 + $0x1a] sm:$0x1]
  %v2272 = vmul.f32 %v2248, %v2263
  %v2273 = vsub.f32 %v2271, %v2272
  %v2275 = vlaneseq
  %v2276 = vshrl.u32 %v2275, 7
  %v2277 = vsub.s32 0, %v2276
  %v2278 = vrot.slane %v2273, %v2277
  %v2280 = vadd.f32 %v2270, %v2278
  %v2281 = vsel %vm2240, %v2280, -inf
  %2282 = vmax.xlane.f32.xlu0 %v2281
  %v2283 = vpop.xlane.xlu0 %2282
  %v2284 = vsub.f32 %v2280, %v2283
  %v2285 = vmul.f32 %v2284, 1.442695
  %v2286 = vpow.pop %v2285
  %v2287 = vsel %vm2240, %v2286, 0.0
  %2288 = vadd.xlane.f32.xlu0 %v2287
  %v2289 = vpop.xlane.xlu0 %2288
  %v2290 = vrcp.pop %v2289
  %v2291 = vmul.f32 %v2286, %v2290
  %2293 = vrot.lane.b32.xlu0 %v1673, 32
  %v2294 = vpop.permute.xlu0 %2293
  %2296 = vst.msk [vmem:[%s12] sm:$0xff] %vm1472, %v2294
  %vm2297 = vcmask 523520
  %2298 = vst.msk [vmem:[%s12] sm:$0xff] %vm2297, %v1667
  %2300 = vrot.lane.b32.xlu0 %v2291, 64
  %v2301 = vpop.permute.xlu0 %2300
  %vm2303 = vcmask 556544
  %2304 = vst.msk [vmem:[%s12] sm:$0xff] %vm2303, %v2301
  %vm2305 = vcmask 1048096
  %2306 = vst.msk [vmem:[%s12] sm:$0xff] %vm2305, 0.0
  // Predicated region
  $region50: #{slip_detect_global_lstm_forward.1} parent=0 // pred_check
    _
  $region51: #{slip_detect_global_lstm_forward.1} parent=0 // pred_check_branch
    %2308 = sbr.rel (0) target = $region53
  $region52: #{slip_detect_global_lstm_forward.1} parent=0 // pred_region
    _
  $region53: #{slip_detect_global_lstm_forward.1} parent=0 // pred_fallthru
    _
  // Predicated region
  $region54: #{slip_detect_global_lstm_forward.1} parent=0 // pred_check
    _
  $region55: #{slip_detect_global_lstm_forward.1} parent=0 // pred_check_branch
    %2310 = sbr.rel (0) target = $region57
  $region56: #{slip_detect_global_lstm_forward.1} parent=0 // pred_region
    _
  $region57: #{slip_detect_global_lstm_forward.1} parent=0 // pred_fallthru
    _

</llo_original>
